<compile_context>
chip_gen: v6e
topology: v6e:2x2x1
jax: 0.10.0
libtpu: 0.0.40
codegen_flags: <defaults>
</compile_context>

<pallas_src>
import jax
import jax.numpy as jnp
from jax.experimental import pallas as pl
from jax.experimental.pallas import tpu as pltpu

# ----------------------------- model hyper-params -----------------------------
NUM_EEG_CHANNELS = 8      # num_eeg_channels (small)
C1_OUT = 8                # c1_spatial_kernelSize
C2_FILTERS = 16           # c2_numFilters
C2_K = 9                  # c2_temporal_kernelSize
C2_S = 3                  # c2_temporal_stride
LSTM_SIZE = 32            # lstm_size (shared by both branches)
TEXT_INP = 32             # lstm_textnw inp_size (small stand-in for 300)
LSTM_IN_EEG = C1_OUT * C2_FILTERS   # 128
BN_EPS = 1e-5

VMEM_SPEC = pl.BlockSpec(memory_space=pltpu.MemorySpace.VMEM)


# ============================= parameter creation =============================

def _uniform(key, shape, scale):
    return jax.random.uniform(key, shape, jnp.float32, -scale, scale)


def init_params(key):
    ks = jax.random.split(key, 16)
    h = LSTM_SIZE
    k_lstm = 1.0 / jnp.sqrt(h)
    return {
        # ---- text 2-layer LSTM (PyTorch gate order i,f,g,o; W stored [D, 4H])
        "t_wih0": _uniform(ks[0], (TEXT_INP, 4 * h), k_lstm),
        "t_whh0": _uniform(ks[1], (h, 4 * h), k_lstm),
        "t_b0": _uniform(ks[2], (1, 4 * h), k_lstm) + _uniform(ks[3], (1, 4 * h), k_lstm),
        "t_wih1": _uniform(ks[4], (h, 4 * h), k_lstm),
        "t_whh1": _uniform(ks[5], (h, 4 * h), k_lstm),
        "t_b1": _uniform(ks[6], (1, 4 * h), k_lstm) + _uniform(ks[7], (1, 4 * h), k_lstm),
        # ---- EEG branch
        "c1_w": _uniform(ks[8], (C1_OUT, NUM_EEG_CHANNELS), 1.0 / jnp.sqrt(NUM_EEG_CHANNELS)),
        "c1_b": _uniform(ks[9], (C1_OUT,), 1.0 / jnp.sqrt(NUM_EEG_CHANNELS)),
        "c2_w": _uniform(ks[10], (C2_FILTERS, C2_K), 1.0 / jnp.sqrt(C2_K)),
        "c2_b": _uniform(ks[11], (C2_FILTERS,), 1.0 / jnp.sqrt(C2_K)),
        # BatchNorm2d eval with default running stats / affine
        "bn2_scale": jnp.full((C2_FILTERS,), 1.0 / jnp.sqrt(1.0 + BN_EPS), jnp.float32),
        "bn2_shift": jnp.zeros((C2_FILTERS,), jnp.float32),
        # EEG LSTM (input feature index = f*C1 + c1, f major, matching torch reshape)
        "e_wih": _uniform(ks[12], (LSTM_IN_EEG, 4 * h), k_lstm),
        "e_whh": _uniform(ks[13], (h, 4 * h), k_lstm),
        "e_b": _uniform(ks[14], (1, 4 * h), k_lstm) + _uniform(ks[15], (1, 4 * h), k_lstm),
    }


# ================================ forward pass ================================

@jax.jit
def model_text_eeg_forward(params, text_feat, eeg_feat, sent_num_words,
                           word_onset_time, word_offset_time):
    f32, bf16 = jnp.float32, jnp.bfloat16
    batch, d_text, nw = text_feat.shape
    _, cin, t_eeg = eeg_feat.shape
    hid = LSTM_SIZE
    g4 = 4 * hid
    t2 = (t_eeg - C2_K) // C2_S + 1
    bpad = max(8, -(-batch // 8) * 8)          # pad batch to a sublane group
    t2pad = -(-t2 // 8) * 8                    # pad conv-output frames to sublane group
    s = sent_num_words.astype(jnp.int32)

    # ----------- wrapper-side (XLA) layout plumbing: tiny, lane/sublane aligned -----------
    word_valid = jnp.arange(nw)[:, None] < s[None, :]                       # [NW, B]
    mask = jnp.pad(word_valid.astype(f32), ((0, 0), (0, bpad - batch)))     # [NW, Bpad]
    mask = jnp.broadcast_to(mask[:, :, None], (nw, bpad, hid))              # [NW, Bpad, H]

    # text: BatchNorm1d (eval, default stats) folded into layer-0 W_ih; batch padded to 8
    xt = jnp.transpose(text_feat, (2, 0, 1))                                # [NW, B, D]
    xt = jnp.pad(xt, ((0, 0), (0, bpad - batch), (0, 0))).reshape(nw * bpad, d_text)
    wih0_eff = params["t_wih0"] * (1.0 / jnp.sqrt(1.0 + BN_EPS))

    # EEG: im2col windows Xwin[(b,t2),(k,cin)] (conv1 is 1x1 so it commutes with windowing)
    t2_ax = jnp.arange(t2pad)
    k_ax = jnp.arange(C2_K)
    tpos = C2_S * t2_ax[:, None] + k_ax[None, :]                            # [T2pad, K]
    valid_pos = (tpos < t_eeg) & (t2_ax[:, None] < t2)
    xg = eeg_feat[:, :, jnp.clip(tpos, 0, t_eeg - 1)]                       # [B, Cin, T2pad, K]
    xg = jnp.where(valid_pos[None, None], xg, 0.0)
    xwin = jnp.transpose(xg, (0, 2, 3, 1)).reshape(batch * t2pad, C2_K * cin)

    # conv1 as block-diag [(k,cin) -> (k,c1)]; conv2+BN as [(k,c1) -> (f,c1)]
    w1blk = jnp.kron(jnp.eye(C2_K, dtype=f32), params["c1_w"].T)            # [K*Cin, K*C1]
    b1row = jnp.tile(params["c1_b"], (C2_K,))[None, :]                      # [1, K*C1]
    w2_eff = params["c2_w"] * params["bn2_scale"][:, None]                  # [F, K]
    b2_eff = params["c2_b"] * params["bn2_scale"] + params["bn2_shift"]     # [F]
    w2blk = jnp.einsum("fk,ce->kcfe", w2_eff, jnp.eye(C1_OUT, dtype=f32)
                       ).reshape(C2_K * C1_OUT, C2_FILTERS * C1_OUT)        # [K*C1, F*C1]
    b2row = jnp.repeat(b2_eff, C1_OUT)[None, :]                             # [1, F*C1]

    # word-window average pooling matrix (utils.time_to_index / avg_pooling stand-in)
    on_idx = jnp.clip(jnp.floor(word_onset_time / C2_S).astype(jnp.int32), 0, t2 - 1)
    off_idx = jnp.clip(jnp.floor(word_offset_time / C2_S).astype(jnp.int32), 0, t2 - 1)
    t_ax2 = jnp.arange(t2pad)[None, None, :]
    seg = ((t_ax2 >= on_idx[:, :, None]) & (t_ax2 <= off_idx[:, :, None])).astype(f32)
    cnt = jnp.maximum(jnp.sum(seg, axis=-1, keepdims=True), 1.0)
    pool = seg / cnt * word_valid.T.astype(f32)[:, :, None]                 # [B, NW, T2pad]
    eye_b = jnp.eye(bpad, batch, dtype=f32)                                 # [Bpad, B]
    pbig = jnp.einsum("rb,bwt->wrbt", eye_b, pool).reshape(nw * bpad, batch * t2pad)

    # block-diagonal recurrent weights, bf16 on the serial chain (f32 accumulation)
    zh = jnp.zeros((hid, g4), f32)
    wbig = jnp.concatenate([
        jnp.concatenate([params["t_whh0"], zh, params["t_wih1"]], axis=1),  # h0 rows
        jnp.concatenate([zh, params["e_whh"], zh], axis=1),                 # he rows
        jnp.concatenate([zh, zh, params["t_whh1"]], axis=1),                # h1 rows
    ], axis=0).astype(bf16)                                                 # [3H, 12H]
    wl1 = jnp.concatenate([params["t_wih1"], params["t_whh1"]], axis=0).astype(bf16)

    # --------------------------------- fused kernel ---------------------------------
    def fused_kernel(xt_ref, wih0_ref, b0_ref,
                     xwin_ref, w1blk_ref, b1row_ref, w2blk_ref, b2row_ref,
                     pbig_ref, ewih_ref, eb_ref,
                     wbig_ref, wl1_ref, tb1_ref, mask_ref,
                     yt_ref, ye_ref, prob_ref):
        # hoisted input projections: 1 matmul (text) + 4 lane-dense matmuls (EEG)
        gx0 = jnp.dot(xt_ref[...], wih0_ref[...], preferred_element_type=f32) + b0_ref[...]
        y1w = jnp.maximum(jnp.dot(xwin_ref[...], w1blk_ref[...],
                                  preferred_element_type=f32) + b1row_ref[...], 0.0)
        y2f = jnp.maximum(jnp.dot(y1w, w2blk_ref[...],
                                  preferred_element_type=f32) + b2row_ref[...], 0.0)
        pooled = jnp.dot(pbig_ref[...], y2f, preferred_element_type=f32)    # [(w,b), 128]
        gxe = jnp.dot(pooled, ewih_ref[...], preferred_element_type=f32) + eb_ref[...]

        wbig = wbig_ref[...]
        b1g = tb1_ref[...]

        def cell(gates, c_prev):
            sg = jax.nn.sigmoid(gates)            # whole [Bpad, 4H] tile on EUP
            th = jnp.tanh(gates)
            i_g, f_g = sg[:, 0:hid], sg[:, hid:2 * hid]
            g_g, o_g = th[:, 2 * hid:3 * hid], sg[:, 3 * hid:4 * hid]
            c_new = f_g * c_prev + i_g * g_g
            return o_g * jnp.tanh(c_new), c_new

        z = jnp.zeros((bpad, hid), f32)
        h0, c0, he, ce, h1, c1 = z, z, z, z, z, z

        # Wavefront: ONE block-diagonal matmul per step drives text layer-0 (step w),
        # EEG LSTM (step w) and text layer-1 (step w-1, using h0 from the loop carry).
        for w in range(nw):                        # fully unrolled (nw small & static)
            big = jnp.dot(jnp.concatenate([h0, he, h1], axis=1).astype(bf16),
                          wbig, preferred_element_type=f32)                 # [Bpad, 12H]
            keep = mask_ref[w] > 0.5               # packed-sequence freeze
            h0n, c0n = cell(big[:, 0:g4] + gx0[w * bpad:(w + 1) * bpad, :], c0)
            hen, cen = cell(big[:, g4:2 * g4] + gxe[w * bpad:(w + 1) * bpad, :], ce)
            if w >= 1:
                keep_p = mask_ref[w - 1] > 0.5
                h1n, c1n = cell(big[:, 2 * g4:3 * g4] + b1g, c1)
                h1 = jnp.where(keep_p, h1n, h1)
                c1 = jnp.where(keep_p, c1n, c1)
            h0 = jnp.where(keep, h0n, h0)
            c0 = jnp.where(keep, c0n, c0)
            he = jnp.where(keep, hen, he)
            ce = jnp.where(keep, cen, ce)

        # final text layer-1 step (nw-1)
        gates1 = jnp.dot(jnp.concatenate([h0, h1], axis=1).astype(bf16),
                         wl1_ref[...], preferred_element_type=f32) + b1g
        h1n, _ = cell(gates1, c1)
        keep_l = mask_ref[nw - 1] > 0.5
        h1 = jnp.where(keep_l, h1n, h1)

        # -------------------------- similarity epilogue --------------------------
        yt_ref[...] = h1
        ye_ref[...] = he
        dist = jnp.sum(jnp.abs(h1 - he), axis=1, keepdims=True)
        prob_ref[...] = jnp.exp(-dist)

    y_text, y_eeg, prob = pl.pallas_call(
        fused_kernel,
        out_shape=(jax.ShapeDtypeStruct((bpad, hid), f32),
                   jax.ShapeDtypeStruct((bpad, hid), f32),
                   jax.ShapeDtypeStruct((bpad, 1), f32)),
        in_specs=[VMEM_SPEC] * 15,
        out_specs=(VMEM_SPEC, VMEM_SPEC, VMEM_SPEC),
    )(xt, wih0_eff, params["t_b0"],
      xwin, w1blk, b1row, w2blk, b2row,
      pbig, params["e_wih"], params["e_b"],
      wbig, wl1, params["t_b1"], mask)

    return y_text[:batch], y_eeg[:batch], prob[:batch, 0]


# ==================================== main ====================================

if __name__ == "__main__":
    key = jax.random.PRNGKey(0)
    k_par, k_text, k_eeg = jax.random.split(key, 3)

    params = init_params(k_par)

    B = 2
    NW_MAX = 6
    T_EEG = 64

    text_feat = jax.random.normal(k_text, (B, TEXT_INP, NW_MAX), jnp.float32)
    eeg_feat = jax.random.normal(k_eeg, (B, NUM_EEG_CHANNELS, T_EEG), jnp.float32)
    sent_num_words = jnp.array([6, 4], jnp.int32)
    # word on/offset times in raw EEG-sample units, padded to NW_MAX
    word_onset_time = jnp.tile(jnp.arange(NW_MAX, dtype=jnp.float32)[None, :] * 10.0, (B, 1))
    word_offset_time = word_onset_time + 8.0

    y_text, y_eeg, out_prob = model_text_eeg_forward(
        params, text_feat, eeg_feat, sent_num_words, word_onset_time, word_offset_time)
    jax.block_until_ready((y_text, y_eeg, out_prob))

    assert y_text.shape == (B, LSTM_SIZE)
    assert y_eeg.shape == (B, LSTM_SIZE)
    assert out_prob.shape == (B,)
    assert bool(jnp.all(jnp.isfinite(y_text)))
    assert bool(jnp.all(jnp.isfinite(y_eeg)))
    assert bool(jnp.all((out_prob > 0.0) & (out_prob <= 1.0)))
    print("KERNEL_OK")
</pallas_src>

<mosaic_0001>
module attributes {stable_mosaic.version = 11 : i64} {
  func.func @fused_kernel(%arg0: memref<48x32xf32, #tpu.memory_space<vmem>>, %arg1: memref<32x128xf32, #tpu.memory_space<vmem>>, %arg2: memref<1x128xf32, #tpu.memory_space<vmem>>, %arg3: memref<48x72xf32, #tpu.memory_space<vmem>>, %arg4: memref<72x72xf32, #tpu.memory_space<vmem>>, %arg5: memref<1x72xf32, #tpu.memory_space<vmem>>, %arg6: memref<72x128xf32, #tpu.memory_space<vmem>>, %arg7: memref<1x128xf32, #tpu.memory_space<vmem>>, %arg8: memref<48x48xf32, #tpu.memory_space<vmem>>, %arg9: memref<128x128xf32, #tpu.memory_space<vmem>>, %arg10: memref<1x128xf32, #tpu.memory_space<vmem>>, %arg11: memref<96x384xbf16, #tpu.memory_space<vmem>>, %arg12: memref<64x128xbf16, #tpu.memory_space<vmem>>, %arg13: memref<1x128xf32, #tpu.memory_space<vmem>>, %arg14: memref<6x8x32xf32, #tpu.memory_space<vmem>>, %arg15: memref<8x32xf32, #tpu.memory_space<vmem>>, %arg16: memref<8x32xf32, #tpu.memory_space<vmem>>, %arg17: memref<8x1xf32, #tpu.memory_space<vmem>>) attributes {dimension_semantics = [], scalar_prefetch = 0 : i64, scratch_operands = 0 : i64, tpu.core_type = #tpu.core_type<tc>} {
    %c0 = arith.constant 0 : index
    %c0_0 = arith.constant 0 : index
    %0 = vector.load %arg0[%c0, %c0_0] : memref<48x32xf32, #tpu.memory_space<vmem>>, vector<48x32xf32>
    %c0_1 = arith.constant 0 : index
    %c0_2 = arith.constant 0 : index
    %1 = vector.load %arg1[%c0_1, %c0_2] : memref<32x128xf32, #tpu.memory_space<vmem>>, vector<32x128xf32>
    %cst = arith.constant dense<0.000000e+00> : vector<48x128xf32>
    %2 = tpu.matmul %0, %1, %cst {dimension_numbers = #tpu.dot_dimension_numbers<[1], [0], [0], [1], [0, 0, 1, 1], [], []>} : vector<48x32xf32>, vector<32x128xf32>, vector<48x128xf32> -> vector<48x128xf32>
    %c0_3 = arith.constant 0 : index
    %c0_4 = arith.constant 0 : index
    %3 = vector.load %arg2[%c0_3, %c0_4] : memref<1x128xf32, #tpu.memory_space<vmem>>, vector<1x128xf32>
    %4 = vector.broadcast %3 : vector<1x128xf32> to vector<48x128xf32>
    %5 = arith.addf %2, %4 : vector<48x128xf32>
    %c0_5 = arith.constant 0 : index
    %c0_6 = arith.constant 0 : index
    %6 = vector.load %arg3[%c0_5, %c0_6] : memref<48x72xf32, #tpu.memory_space<vmem>>, vector<48x72xf32>
    %c0_7 = arith.constant 0 : index
    %c0_8 = arith.constant 0 : index
    %7 = vector.load %arg4[%c0_7, %c0_8] : memref<72x72xf32, #tpu.memory_space<vmem>>, vector<72x72xf32>
    %cst_9 = arith.constant dense<0.000000e+00> : vector<48x72xf32>
    %8 = tpu.matmul %6, %7, %cst_9 {dimension_numbers = #tpu.dot_dimension_numbers<[1], [0], [0], [1], [0, 0, 1, 1], [], []>} : vector<48x72xf32>, vector<72x72xf32>, vector<48x72xf32> -> vector<48x72xf32>
    %c0_10 = arith.constant 0 : index
    %c0_11 = arith.constant 0 : index
    %9 = vector.load %arg5[%c0_10, %c0_11] : memref<1x72xf32, #tpu.memory_space<vmem>>, vector<1x72xf32>
    %10 = vector.broadcast %9 : vector<1x72xf32> to vector<48x72xf32>
    %11 = arith.addf %8, %10 : vector<48x72xf32>
    %cst_12 = arith.constant 0.000000e+00 : f32
    %12 = vector.broadcast %cst_12 : f32 to vector<48x72xf32>
    %13 = arith.maximumf %11, %12 : vector<48x72xf32>
    %c0_13 = arith.constant 0 : index
    %c0_14 = arith.constant 0 : index
    %14 = vector.load %arg6[%c0_13, %c0_14] : memref<72x128xf32, #tpu.memory_space<vmem>>, vector<72x128xf32>
    %cst_15 = arith.constant dense<0.000000e+00> : vector<48x128xf32>
    %15 = tpu.matmul %13, %14, %cst_15 {dimension_numbers = #tpu.dot_dimension_numbers<[1], [0], [0], [1], [0, 0, 1, 1], [], []>} : vector<48x72xf32>, vector<72x128xf32>, vector<48x128xf32> -> vector<48x128xf32>
    %c0_16 = arith.constant 0 : index
    %c0_17 = arith.constant 0 : index
    %16 = vector.load %arg7[%c0_16, %c0_17] : memref<1x128xf32, #tpu.memory_space<vmem>>, vector<1x128xf32>
    %17 = vector.broadcast %16 : vector<1x128xf32> to vector<48x128xf32>
    %18 = arith.addf %15, %17 : vector<48x128xf32>
    %cst_18 = arith.constant 0.000000e+00 : f32
    %19 = vector.broadcast %cst_18 : f32 to vector<48x128xf32>
    %20 = arith.maximumf %18, %19 : vector<48x128xf32>
    %c0_19 = arith.constant 0 : index
    %c0_20 = arith.constant 0 : index
    %21 = vector.load %arg8[%c0_19, %c0_20] : memref<48x48xf32, #tpu.memory_space<vmem>>, vector<48x48xf32>
    %cst_21 = arith.constant dense<0.000000e+00> : vector<48x128xf32>
    %22 = tpu.matmul %21, %20, %cst_21 {dimension_numbers = #tpu.dot_dimension_numbers<[1], [0], [0], [1], [0, 0, 1, 1], [], []>} : vector<48x48xf32>, vector<48x128xf32>, vector<48x128xf32> -> vector<48x128xf32>
    %c0_22 = arith.constant 0 : index
    %c0_23 = arith.constant 0 : index
    %23 = vector.load %arg9[%c0_22, %c0_23] : memref<128x128xf32, #tpu.memory_space<vmem>>, vector<128x128xf32>
    %cst_24 = arith.constant dense<0.000000e+00> : vector<48x128xf32>
    %24 = tpu.matmul %22, %23, %cst_24 {dimension_numbers = #tpu.dot_dimension_numbers<[1], [0], [0], [1], [0, 0, 1, 1], [], []>} : vector<48x128xf32>, vector<128x128xf32>, vector<48x128xf32> -> vector<48x128xf32>
    %c0_25 = arith.constant 0 : index
    %c0_26 = arith.constant 0 : index
    %25 = vector.load %arg10[%c0_25, %c0_26] : memref<1x128xf32, #tpu.memory_space<vmem>>, vector<1x128xf32>
    %26 = vector.broadcast %25 : vector<1x128xf32> to vector<48x128xf32>
    %27 = arith.addf %24, %26 : vector<48x128xf32>
    %c0_27 = arith.constant 0 : index
    %c0_28 = arith.constant 0 : index
    %28 = vector.load %arg11[%c0_27, %c0_28] : memref<96x384xbf16, #tpu.memory_space<vmem>>, vector<96x384xbf16>
    %c0_29 = arith.constant 0 : index
    %c0_30 = arith.constant 0 : index
    %29 = vector.load %arg13[%c0_29, %c0_30] : memref<1x128xf32, #tpu.memory_space<vmem>>, vector<1x128xf32>
    %cst_31 = arith.constant 0.000000e+00 : f32
    %30 = vector.broadcast %cst_31 : f32 to vector<8x32xf32>
    %31 = tpu.concatenate %30, %30, %30 in 1 : vector<8x32xf32>, vector<8x32xf32>, vector<8x32xf32> -> vector<8x96xf32>
    %32 = arith.truncf %31 : vector<8x96xf32> to vector<8x96xbf16>
    %cst_32 = arith.constant dense<0.000000e+00> : vector<8x384xf32>
    %33 = tpu.matmul %32, %28, %cst_32 {dimension_numbers = #tpu.dot_dimension_numbers<[1], [0], [0], [1], [0, 0, 1, 1], [], []>} : vector<8x96xbf16>, vector<96x384xbf16>, vector<8x384xf32> -> vector<8x384xf32>
    %c0_33 = arith.constant 0 : index
    %c0_34 = arith.constant 0 : index
    %c0_35 = arith.constant 0 : index
    %34 = vector.load %arg14[%c0_33, %c0_34, %c0_35] : memref<6x8x32xf32, #tpu.memory_space<vmem>>, vector<1x8x32xf32>
    %35 = vector.shape_cast %34 : vector<1x8x32xf32> to vector<8x32xf32>
    %cst_36 = arith.constant 5.000000e-01 : f32
    %36 = vector.broadcast %cst_36 : f32 to vector<8x32xf32>
    %37 = arith.cmpf ogt, %35, %36 : vector<8x32xf32>
    %38 = vector.extract_strided_slice %33 {offsets = [0, 0], sizes = [8, 128], strides = [1, 1]} : vector<8x384xf32> to vector<8x128xf32>
    %39 = vector.extract_strided_slice %5 {offsets = [0, 0], sizes = [8, 128], strides = [1, 1]} : vector<48x128xf32> to vector<8x128xf32>
    %40 = arith.addf %38, %39 : vector<8x128xf32>
    %41 = arith.negf %40 : vector<8x128xf32>
    %42 = math.exp %41 : vector<8x128xf32>
    %cst_37 = arith.constant 1.000000e+00 : f32
    %43 = vector.broadcast %cst_37 : f32 to vector<8x128xf32>
    %44 = arith.addf %43, %42 : vector<8x128xf32>
    %45 = arith.divf %43, %44 : vector<8x128xf32>
    %46 = math.tanh %40 : vector<8x128xf32>
    %47 = vector.extract_strided_slice %45 {offsets = [0, 0], sizes = [8, 32], strides = [1, 1]} : vector<8x128xf32> to vector<8x32xf32>
    %48 = vector.extract_strided_slice %45 {offsets = [0, 32], sizes = [8, 32], strides = [1, 1]} : vector<8x128xf32> to vector<8x32xf32>
    %49 = vector.extract_strided_slice %46 {offsets = [0, 64], sizes = [8, 32], strides = [1, 1]} : vector<8x128xf32> to vector<8x32xf32>
    %50 = vector.extract_strided_slice %45 {offsets = [0, 96], sizes = [8, 32], strides = [1, 1]} : vector<8x128xf32> to vector<8x32xf32>
    %51 = arith.mulf %48, %30 : vector<8x32xf32>
    %52 = arith.mulf %47, %49 : vector<8x32xf32>
    %53 = arith.addf %51, %52 : vector<8x32xf32>
    %54 = math.tanh %53 : vector<8x32xf32>
    %55 = arith.mulf %50, %54 : vector<8x32xf32>
    %56 = vector.extract_strided_slice %33 {offsets = [0, 128], sizes = [8, 128], strides = [1, 1]} : vector<8x384xf32> to vector<8x128xf32>
    %57 = vector.extract_strided_slice %27 {offsets = [0, 0], sizes = [8, 128], strides = [1, 1]} : vector<48x128xf32> to vector<8x128xf32>
    %58 = arith.addf %56, %57 : vector<8x128xf32>
    %59 = arith.negf %58 : vector<8x128xf32>
    %60 = math.exp %59 : vector<8x128xf32>
    %cst_38 = arith.constant 1.000000e+00 : f32
    %61 = vector.broadcast %cst_38 : f32 to vector<8x128xf32>
    %62 = arith.addf %61, %60 : vector<8x128xf32>
    %63 = arith.divf %61, %62 : vector<8x128xf32>
    %64 = math.tanh %58 : vector<8x128xf32>
    %65 = vector.extract_strided_slice %63 {offsets = [0, 0], sizes = [8, 32], strides = [1, 1]} : vector<8x128xf32> to vector<8x32xf32>
    %66 = vector.extract_strided_slice %63 {offsets = [0, 32], sizes = [8, 32], strides = [1, 1]} : vector<8x128xf32> to vector<8x32xf32>
    %67 = vector.extract_strided_slice %64 {offsets = [0, 64], sizes = [8, 32], strides = [1, 1]} : vector<8x128xf32> to vector<8x32xf32>
    %68 = vector.extract_strided_slice %63 {offsets = [0, 96], sizes = [8, 32], strides = [1, 1]} : vector<8x128xf32> to vector<8x32xf32>
    %69 = arith.mulf %66, %30 : vector<8x32xf32>
    %70 = arith.mulf %65, %67 : vector<8x32xf32>
    %71 = arith.addf %69, %70 : vector<8x32xf32>
    %72 = math.tanh %71 : vector<8x32xf32>
    %73 = arith.mulf %68, %72 : vector<8x32xf32>
    %74 = arith.select %37, %55, %30 : vector<8x32xi1>, vector<8x32xf32>
    %75 = arith.select %37, %53, %30 : vector<8x32xi1>, vector<8x32xf32>
    %76 = arith.select %37, %73, %30 : vector<8x32xi1>, vector<8x32xf32>
    %77 = arith.select %37, %71, %30 : vector<8x32xi1>, vector<8x32xf32>
    %78 = tpu.concatenate %74, %76, %30 in 1 : vector<8x32xf32>, vector<8x32xf32>, vector<8x32xf32> -> vector<8x96xf32>
    %79 = arith.truncf %78 : vector<8x96xf32> to vector<8x96xbf16>
    %cst_39 = arith.constant dense<0.000000e+00> : vector<8x384xf32>
    %80 = tpu.matmul %79, %28, %cst_39 {dimension_numbers = #tpu.dot_dimension_numbers<[1], [0], [0], [1], [0, 0, 1, 1], [], []>} : vector<8x96xbf16>, vector<96x384xbf16>, vector<8x384xf32> -> vector<8x384xf32>
    %c1 = arith.constant 1 : index
    %c0_40 = arith.constant 0 : index
    %c0_41 = arith.constant 0 : index
    %81 = vector.load %arg14[%c1, %c0_40, %c0_41] : memref<6x8x32xf32, #tpu.memory_space<vmem>>, vector<1x8x32xf32>
    %82 = vector.shape_cast %81 : vector<1x8x32xf32> to vector<8x32xf32>
    %cst_42 = arith.constant 5.000000e-01 : f32
    %83 = vector.broadcast %cst_42 : f32 to vector<8x32xf32>
    %84 = arith.cmpf ogt, %82, %83 : vector<8x32xf32>
    %85 = vector.extract_strided_slice %80 {offsets = [0, 0], sizes = [8, 128], strides = [1, 1]} : vector<8x384xf32> to vector<8x128xf32>
    %86 = vector.extract_strided_slice %5 {offsets = [8, 0], sizes = [8, 128], strides = [1, 1]} : vector<48x128xf32> to vector<8x128xf32>
    %87 = arith.addf %85, %86 : vector<8x128xf32>
    %88 = arith.negf %87 : vector<8x128xf32>
    %89 = math.exp %88 : vector<8x128xf32>
    %cst_43 = arith.constant 1.000000e+00 : f32
    %90 = vector.broadcast %cst_43 : f32 to vector<8x128xf32>
    %91 = arith.addf %90, %89 : vector<8x128xf32>
    %92 = arith.divf %90, %91 : vector<8x128xf32>
    %93 = math.tanh %87 : vector<8x128xf32>
    %94 = vector.extract_strided_slice %92 {offsets = [0, 0], sizes = [8, 32], strides = [1, 1]} : vector<8x128xf32> to vector<8x32xf32>
    %95 = vector.extract_strided_slice %92 {offsets = [0, 32], sizes = [8, 32], strides = [1, 1]} : vector<8x128xf32> to vector<8x32xf32>
    %96 = vector.extract_strided_slice %93 {offsets = [0, 64], sizes = [8, 32], strides = [1, 1]} : vector<8x128xf32> to vector<8x32xf32>
    %97 = vector.extract_strided_slice %92 {offsets = [0, 96], sizes = [8, 32], strides = [1, 1]} : vector<8x128xf32> to vector<8x32xf32>
    %98 = arith.mulf %95, %75 : vector<8x32xf32>
    %99 = arith.mulf %94, %96 : vector<8x32xf32>
    %100 = arith.addf %98, %99 : vector<8x32xf32>
    %101 = math.tanh %100 : vector<8x32xf32>
    %102 = arith.mulf %97, %101 : vector<8x32xf32>
    %103 = vector.extract_strided_slice %80 {offsets = [0, 128], sizes = [8, 128], strides = [1, 1]} : vector<8x384xf32> to vector<8x128xf32>
    %104 = vector.extract_strided_slice %27 {offsets = [8, 0], sizes = [8, 128], strides = [1, 1]} : vector<48x128xf32> to vector<8x128xf32>
    %105 = arith.addf %103, %104 : vector<8x128xf32>
    %106 = arith.negf %105 : vector<8x128xf32>
    %107 = math.exp %106 : vector<8x128xf32>
    %cst_44 = arith.constant 1.000000e+00 : f32
    %108 = vector.broadcast %cst_44 : f32 to vector<8x128xf32>
    %109 = arith.addf %108, %107 : vector<8x128xf32>
    %110 = arith.divf %108, %109 : vector<8x128xf32>
    %111 = math.tanh %105 : vector<8x128xf32>
    %112 = vector.extract_strided_slice %110 {offsets = [0, 0], sizes = [8, 32], strides = [1, 1]} : vector<8x128xf32> to vector<8x32xf32>
    %113 = vector.extract_strided_slice %110 {offsets = [0, 32], sizes = [8, 32], strides = [1, 1]} : vector<8x128xf32> to vector<8x32xf32>
    %114 = vector.extract_strided_slice %111 {offsets = [0, 64], sizes = [8, 32], strides = [1, 1]} : vector<8x128xf32> to vector<8x32xf32>
    %115 = vector.extract_strided_slice %110 {offsets = [0, 96], sizes = [8, 32], strides = [1, 1]} : vector<8x128xf32> to vector<8x32xf32>
    %116 = arith.mulf %113, %77 : vector<8x32xf32>
    %117 = arith.mulf %112, %114 : vector<8x32xf32>
    %118 = arith.addf %116, %117 : vector<8x32xf32>
    %119 = math.tanh %118 : vector<8x32xf32>
    %120 = arith.mulf %115, %119 : vector<8x32xf32>
    %c0_45 = arith.constant 0 : index
    %c0_46 = arith.constant 0 : index
    %c0_47 = arith.constant 0 : index
    %121 = vector.load %arg14[%c0_45, %c0_46, %c0_47] : memref<6x8x32xf32, #tpu.memory_space<vmem>>, vector<1x8x32xf32>
    %122 = vector.shape_cast %121 : vector<1x8x32xf32> to vector<8x32xf32>
    %cst_48 = arith.constant 5.000000e-01 : f32
    %123 = vector.broadcast %cst_48 : f32 to vector<8x32xf32>
    %124 = arith.cmpf ogt, %122, %123 : vector<8x32xf32>
    %125 = vector.extract_strided_slice %80 {offsets = [0, 256], sizes = [8, 128], strides = [1, 1]} : vector<8x384xf32> to vector<8x128xf32>
    %126 = vector.broadcast %29 : vector<1x128xf32> to vector<8x128xf32>
    %127 = arith.addf %125, %126 : vector<8x128xf32>
    %128 = arith.negf %127 : vector<8x128xf32>
    %129 = math.exp %128 : vector<8x128xf32>
    %cst_49 = arith.constant 1.000000e+00 : f32
    %130 = vector.broadcast %cst_49 : f32 to vector<8x128xf32>
    %131 = arith.addf %130, %129 : vector<8x128xf32>
    %132 = arith.divf %130, %131 : vector<8x128xf32>
    %133 = math.tanh %127 : vector<8x128xf32>
    %134 = vector.extract_strided_slice %132 {offsets = [0, 0], sizes = [8, 32], strides = [1, 1]} : vector<8x128xf32> to vector<8x32xf32>
    %135 = vector.extract_strided_slice %132 {offsets = [0, 32], sizes = [8, 32], strides = [1, 1]} : vector<8x128xf32> to vector<8x32xf32>
    %136 = vector.extract_strided_slice %133 {offsets = [0, 64], sizes = [8, 32], strides = [1, 1]} : vector<8x128xf32> to vector<8x32xf32>
    %137 = vector.extract_strided_slice %132 {offsets = [0, 96], sizes = [8, 32], strides = [1, 1]} : vector<8x128xf32> to vector<8x32xf32>
    %138 = arith.mulf %135, %30 : vector<8x32xf32>
    %139 = arith.mulf %134, %136 : vector<8x32xf32>
    %140 = arith.addf %138, %139 : vector<8x32xf32>
    %141 = math.tanh %140 : vector<8x32xf32>
    %142 = arith.mulf %137, %141 : vector<8x32xf32>
    %143 = arith.select %124, %142, %30 : vector<8x32xi1>, vector<8x32xf32>
    %144 = arith.select %124, %140, %30 : vector<8x32xi1>, vector<8x32xf32>
    %145 = arith.select %84, %102, %74 : vector<8x32xi1>, vector<8x32xf32>
    %146 = arith.select %84, %100, %75 : vector<8x32xi1>, vector<8x32xf32>
    %147 = arith.select %84, %120, %76 : vector<8x32xi1>, vector<8x32xf32>
    %148 = arith.select %84, %118, %77 : vector<8x32xi1>, vector<8x32xf32>
    %149 = tpu.concatenate %145, %147, %143 in 1 : vector<8x32xf32>, vector<8x32xf32>, vector<8x32xf32> -> vector<8x96xf32>
    %150 = arith.truncf %149 : vector<8x96xf32> to vector<8x96xbf16>
    %cst_50 = arith.constant dense<0.000000e+00> : vector<8x384xf32>
    %151 = tpu.matmul %150, %28, %cst_50 {dimension_numbers = #tpu.dot_dimension_numbers<[1], [0], [0], [1], [0, 0, 1, 1], [], []>} : vector<8x96xbf16>, vector<96x384xbf16>, vector<8x384xf32> -> vector<8x384xf32>
    %c2 = arith.constant 2 : index
    %c0_51 = arith.constant 0 : index
    %c0_52 = arith.constant 0 : index
    %152 = vector.load %arg14[%c2, %c0_51, %c0_52] : memref<6x8x32xf32, #tpu.memory_space<vmem>>, vector<1x8x32xf32>
    %153 = vector.shape_cast %152 : vector<1x8x32xf32> to vector<8x32xf32>
    %cst_53 = arith.constant 5.000000e-01 : f32
    %154 = vector.broadcast %cst_53 : f32 to vector<8x32xf32>
    %155 = arith.cmpf ogt, %153, %154 : vector<8x32xf32>
    %156 = vector.extract_strided_slice %151 {offsets = [0, 0], sizes = [8, 128], strides = [1, 1]} : vector<8x384xf32> to vector<8x128xf32>
    %157 = vector.extract_strided_slice %5 {offsets = [16, 0], sizes = [8, 128], strides = [1, 1]} : vector<48x128xf32> to vector<8x128xf32>
    %158 = arith.addf %156, %157 : vector<8x128xf32>
    %159 = arith.negf %158 : vector<8x128xf32>
    %160 = math.exp %159 : vector<8x128xf32>
    %cst_54 = arith.constant 1.000000e+00 : f32
    %161 = vector.broadcast %cst_54 : f32 to vector<8x128xf32>
    %162 = arith.addf %161, %160 : vector<8x128xf32>
    %163 = arith.divf %161, %162 : vector<8x128xf32>
    %164 = math.tanh %158 : vector<8x128xf32>
    %165 = vector.extract_strided_slice %163 {offsets = [0, 0], sizes = [8, 32], strides = [1, 1]} : vector<8x128xf32> to vector<8x32xf32>
    %166 = vector.extract_strided_slice %163 {offsets = [0, 32], sizes = [8, 32], strides = [1, 1]} : vector<8x128xf32> to vector<8x32xf32>
    %167 = vector.extract_strided_slice %164 {offsets = [0, 64], sizes = [8, 32], strides = [1, 1]} : vector<8x128xf32> to vector<8x32xf32>
    %168 = vector.extract_strided_slice %163 {offsets = [0, 96], sizes = [8, 32], strides = [1, 1]} : vector<8x128xf32> to vector<8x32xf32>
    %169 = arith.mulf %166, %146 : vector<8x32xf32>
    %170 = arith.mulf %165, %167 : vector<8x32xf32>
    %171 = arith.addf %169, %170 : vector<8x32xf32>
    %172 = math.tanh %171 : vector<8x32xf32>
    %173 = arith.mulf %168, %172 : vector<8x32xf32>
    %174 = vector.extract_strided_slice %151 {offsets = [0, 128], sizes = [8, 128], strides = [1, 1]} : vector<8x384xf32> to vector<8x128xf32>
    %175 = vector.extract_strided_slice %27 {offsets = [16, 0], sizes = [8, 128], strides = [1, 1]} : vector<48x128xf32> to vector<8x128xf32>
    %176 = arith.addf %174, %175 : vector<8x128xf32>
    %177 = arith.negf %176 : vector<8x128xf32>
    %178 = math.exp %177 : vector<8x128xf32>
    %cst_55 = arith.constant 1.000000e+00 : f32
    %179 = vector.broadcast %cst_55 : f32 to vector<8x128xf32>
    %180 = arith.addf %179, %178 : vector<8x128xf32>
    %181 = arith.divf %179, %180 : vector<8x128xf32>
    %182 = math.tanh %176 : vector<8x128xf32>
    %183 = vector.extract_strided_slice %181 {offsets = [0, 0], sizes = [8, 32], strides = [1, 1]} : vector<8x128xf32> to vector<8x32xf32>
    %184 = vector.extract_strided_slice %181 {offsets = [0, 32], sizes = [8, 32], strides = [1, 1]} : vector<8x128xf32> to vector<8x32xf32>
    %185 = vector.extract_strided_slice %182 {offsets = [0, 64], sizes = [8, 32], strides = [1, 1]} : vector<8x128xf32> to vector<8x32xf32>
    %186 = vector.extract_strided_slice %181 {offsets = [0, 96], sizes = [8, 32], strides = [1, 1]} : vector<8x128xf32> to vector<8x32xf32>
    %187 = arith.mulf %184, %148 : vector<8x32xf32>
    %188 = arith.mulf %183, %185 : vector<8x32xf32>
    %189 = arith.addf %187, %188 : vector<8x32xf32>
    %190 = math.tanh %189 : vector<8x32xf32>
    %191 = arith.mulf %186, %190 : vector<8x32xf32>
    %c1_56 = arith.constant 1 : index
    %c0_57 = arith.constant 0 : index
    %c0_58 = arith.constant 0 : index
    %192 = vector.load %arg14[%c1_56, %c0_57, %c0_58] : memref<6x8x32xf32, #tpu.memory_space<vmem>>, vector<1x8x32xf32>
    %193 = vector.shape_cast %192 : vector<1x8x32xf32> to vector<8x32xf32>
    %cst_59 = arith.constant 5.000000e-01 : f32
    %194 = vector.broadcast %cst_59 : f32 to vector<8x32xf32>
    %195 = arith.cmpf ogt, %193, %194 : vector<8x32xf32>
    %196 = vector.extract_strided_slice %151 {offsets = [0, 256], sizes = [8, 128], strides = [1, 1]} : vector<8x384xf32> to vector<8x128xf32>
    %197 = vector.broadcast %29 : vector<1x128xf32> to vector<8x128xf32>
    %198 = arith.addf %196, %197 : vector<8x128xf32>
    %199 = arith.negf %198 : vector<8x128xf32>
    %200 = math.exp %199 : vector<8x128xf32>
    %cst_60 = arith.constant 1.000000e+00 : f32
    %201 = vector.broadcast %cst_60 : f32 to vector<8x128xf32>
    %202 = arith.addf %201, %200 : vector<8x128xf32>
    %203 = arith.divf %201, %202 : vector<8x128xf32>
    %204 = math.tanh %198 : vector<8x128xf32>
    %205 = vector.extract_strided_slice %203 {offsets = [0, 0], sizes = [8, 32], strides = [1, 1]} : vector<8x128xf32> to vector<8x32xf32>
    %206 = vector.extract_strided_slice %203 {offsets = [0, 32], sizes = [8, 32], strides = [1, 1]} : vector<8x128xf32> to vector<8x32xf32>
    %207 = vector.extract_strided_slice %204 {offsets = [0, 64], sizes = [8, 32], strides = [1, 1]} : vector<8x128xf32> to vector<8x32xf32>
    %208 = vector.extract_strided_slice %203 {offsets = [0, 96], sizes = [8, 32], strides = [1, 1]} : vector<8x128xf32> to vector<8x32xf32>
    %209 = arith.mulf %206, %144 : vector<8x32xf32>
    %210 = arith.mulf %205, %207 : vector<8x32xf32>
    %211 = arith.addf %209, %210 : vector<8x32xf32>
    %212 = math.tanh %211 : vector<8x32xf32>
    %213 = arith.mulf %208, %212 : vector<8x32xf32>
    %214 = arith.select %195, %213, %143 : vector<8x32xi1>, vector<8x32xf32>
    %215 = arith.select %195, %211, %144 : vector<8x32xi1>, vector<8x32xf32>
    %216 = arith.select %155, %173, %145 : vector<8x32xi1>, vector<8x32xf32>
    %217 = arith.select %155, %171, %146 : vector<8x32xi1>, vector<8x32xf32>
    %218 = arith.select %155, %191, %147 : vector<8x32xi1>, vector<8x32xf32>
    %219 = arith.select %155, %189, %148 : vector<8x32xi1>, vector<8x32xf32>
    %220 = tpu.concatenate %216, %218, %214 in 1 : vector<8x32xf32>, vector<8x32xf32>, vector<8x32xf32> -> vector<8x96xf32>
    %221 = arith.truncf %220 : vector<8x96xf32> to vector<8x96xbf16>
    %cst_61 = arith.constant dense<0.000000e+00> : vector<8x384xf32>
    %222 = tpu.matmul %221, %28, %cst_61 {dimension_numbers = #tpu.dot_dimension_numbers<[1], [0], [0], [1], [0, 0, 1, 1], [], []>} : vector<8x96xbf16>, vector<96x384xbf16>, vector<8x384xf32> -> vector<8x384xf32>
    %c3 = arith.constant 3 : index
    %c0_62 = arith.constant 0 : index
    %c0_63 = arith.constant 0 : index
    %223 = vector.load %arg14[%c3, %c0_62, %c0_63] : memref<6x8x32xf32, #tpu.memory_space<vmem>>, vector<1x8x32xf32>
    %224 = vector.shape_cast %223 : vector<1x8x32xf32> to vector<8x32xf32>
    %cst_64 = arith.constant 5.000000e-01 : f32
    %225 = vector.broadcast %cst_64 : f32 to vector<8x32xf32>
    %226 = arith.cmpf ogt, %224, %225 : vector<8x32xf32>
    %227 = vector.extract_strided_slice %222 {offsets = [0, 0], sizes = [8, 128], strides = [1, 1]} : vector<8x384xf32> to vector<8x128xf32>
    %228 = vector.extract_strided_slice %5 {offsets = [24, 0], sizes = [8, 128], strides = [1, 1]} : vector<48x128xf32> to vector<8x128xf32>
    %229 = arith.addf %227, %228 : vector<8x128xf32>
    %230 = arith.negf %229 : vector<8x128xf32>
    %231 = math.exp %230 : vector<8x128xf32>
    %cst_65 = arith.constant 1.000000e+00 : f32
    %232 = vector.broadcast %cst_65 : f32 to vector<8x128xf32>
    %233 = arith.addf %232, %231 : vector<8x128xf32>
    %234 = arith.divf %232, %233 : vector<8x128xf32>
    %235 = math.tanh %229 : vector<8x128xf32>
    %236 = vector.extract_strided_slice %234 {offsets = [0, 0], sizes = [8, 32], strides = [1, 1]} : vector<8x128xf32> to vector<8x32xf32>
    %237 = vector.extract_strided_slice %234 {offsets = [0, 32], sizes = [8, 32], strides = [1, 1]} : vector<8x128xf32> to vector<8x32xf32>
    %238 = vector.extract_strided_slice %235 {offsets = [0, 64], sizes = [8, 32], strides = [1, 1]} : vector<8x128xf32> to vector<8x32xf32>
    %239 = vector.extract_strided_slice %234 {offsets = [0, 96], sizes = [8, 32], strides = [1, 1]} : vector<8x128xf32> to vector<8x32xf32>
    %240 = arith.mulf %237, %217 : vector<8x32xf32>
    %241 = arith.mulf %236, %238 : vector<8x32xf32>
    %242 = arith.addf %240, %241 : vector<8x32xf32>
    %243 = math.tanh %242 : vector<8x32xf32>
    %244 = arith.mulf %239, %243 : vector<8x32xf32>
    %245 = vector.extract_strided_slice %222 {offsets = [0, 128], sizes = [8, 128], strides = [1, 1]} : vector<8x384xf32> to vector<8x128xf32>
    %246 = vector.extract_strided_slice %27 {offsets = [24, 0], sizes = [8, 128], strides = [1, 1]} : vector<48x128xf32> to vector<8x128xf32>
    %247 = arith.addf %245, %246 : vector<8x128xf32>
    %248 = arith.negf %247 : vector<8x128xf32>
    %249 = math.exp %248 : vector<8x128xf32>
    %cst_66 = arith.constant 1.000000e+00 : f32
    %250 = vector.broadcast %cst_66 : f32 to vector<8x128xf32>
    %251 = arith.addf %250, %249 : vector<8x128xf32>
    %252 = arith.divf %250, %251 : vector<8x128xf32>
    %253 = math.tanh %247 : vector<8x128xf32>
    %254 = vector.extract_strided_slice %252 {offsets = [0, 0], sizes = [8, 32], strides = [1, 1]} : vector<8x128xf32> to vector<8x32xf32>
    %255 = vector.extract_strided_slice %252 {offsets = [0, 32], sizes = [8, 32], strides = [1, 1]} : vector<8x128xf32> to vector<8x32xf32>
    %256 = vector.extract_strided_slice %253 {offsets = [0, 64], sizes = [8, 32], strides = [1, 1]} : vector<8x128xf32> to vector<8x32xf32>
    %257 = vector.extract_strided_slice %252 {offsets = [0, 96], sizes = [8, 32], strides = [1, 1]} : vector<8x128xf32> to vector<8x32xf32>
    %258 = arith.mulf %255, %219 : vector<8x32xf32>
    %259 = arith.mulf %254, %256 : vector<8x32xf32>
    %260 = arith.addf %258, %259 : vector<8x32xf32>
    %261 = math.tanh %260 : vector<8x32xf32>
    %262 = arith.mulf %257, %261 : vector<8x32xf32>
    %c2_67 = arith.constant 2 : index
    %c0_68 = arith.constant 0 : index
    %c0_69 = arith.constant 0 : index
    %263 = vector.load %arg14[%c2_67, %c0_68, %c0_69] : memref<6x8x32xf32, #tpu.memory_space<vmem>>, vector<1x8x32xf32>
    %264 = vector.shape_cast %263 : vector<1x8x32xf32> to vector<8x32xf32>
    %cst_70 = arith.constant 5.000000e-01 : f32
    %265 = vector.broadcast %cst_70 : f32 to vector<8x32xf32>
    %266 = arith.cmpf ogt, %264, %265 : vector<8x32xf32>
    %267 = vector.extract_strided_slice %222 {offsets = [0, 256], sizes = [8, 128], strides = [1, 1]} : vector<8x384xf32> to vector<8x128xf32>
    %268 = vector.broadcast %29 : vector<1x128xf32> to vector<8x128xf32>
    %269 = arith.addf %267, %268 : vector<8x128xf32>
    %270 = arith.negf %269 : vector<8x128xf32>
    %271 = math.exp %270 : vector<8x128xf32>
    %cst_71 = arith.constant 1.000000e+00 : f32
    %272 = vector.broadcast %cst_71 : f32 to vector<8x128xf32>
    %273 = arith.addf %272, %271 : vector<8x128xf32>
    %274 = arith.divf %272, %273 : vector<8x128xf32>
    %275 = math.tanh %269 : vector<8x128xf32>
    %276 = vector.extract_strided_slice %274 {offsets = [0, 0], sizes = [8, 32], strides = [1, 1]} : vector<8x128xf32> to vector<8x32xf32>
    %277 = vector.extract_strided_slice %274 {offsets = [0, 32], sizes = [8, 32], strides = [1, 1]} : vector<8x128xf32> to vector<8x32xf32>
    %278 = vector.extract_strided_slice %275 {offsets = [0, 64], sizes = [8, 32], strides = [1, 1]} : vector<8x128xf32> to vector<8x32xf32>
    %279 = vector.extract_strided_slice %274 {offsets = [0, 96], sizes = [8, 32], strides = [1, 1]} : vector<8x128xf32> to vector<8x32xf32>
    %280 = arith.mulf %277, %215 : vector<8x32xf32>
    %281 = arith.mulf %276, %278 : vector<8x32xf32>
    %282 = arith.addf %280, %281 : vector<8x32xf32>
    %283 = math.tanh %282 : vector<8x32xf32>
    %284 = arith.mulf %279, %283 : vector<8x32xf32>
    %285 = arith.select %266, %284, %214 : vector<8x32xi1>, vector<8x32xf32>
    %286 = arith.select %266, %282, %215 : vector<8x32xi1>, vector<8x32xf32>
    %287 = arith.select %226, %244, %216 : vector<8x32xi1>, vector<8x32xf32>
    %288 = arith.select %226, %242, %217 : vector<8x32xi1>, vector<8x32xf32>
    %289 = arith.select %226, %262, %218 : vector<8x32xi1>, vector<8x32xf32>
    %290 = arith.select %226, %260, %219 : vector<8x32xi1>, vector<8x32xf32>
    %291 = tpu.concatenate %287, %289, %285 in 1 : vector<8x32xf32>, vector<8x32xf32>, vector<8x32xf32> -> vector<8x96xf32>
    %292 = arith.truncf %291 : vector<8x96xf32> to vector<8x96xbf16>
    %cst_72 = arith.constant dense<0.000000e+00> : vector<8x384xf32>
    %293 = tpu.matmul %292, %28, %cst_72 {dimension_numbers = #tpu.dot_dimension_numbers<[1], [0], [0], [1], [0, 0, 1, 1], [], []>} : vector<8x96xbf16>, vector<96x384xbf16>, vector<8x384xf32> -> vector<8x384xf32>
    %c4 = arith.constant 4 : index
    %c0_73 = arith.constant 0 : index
    %c0_74 = arith.constant 0 : index
    %294 = vector.load %arg14[%c4, %c0_73, %c0_74] : memref<6x8x32xf32, #tpu.memory_space<vmem>>, vector<1x8x32xf32>
    %295 = vector.shape_cast %294 : vector<1x8x32xf32> to vector<8x32xf32>
    %cst_75 = arith.constant 5.000000e-01 : f32
    %296 = vector.broadcast %cst_75 : f32 to vector<8x32xf32>
    %297 = arith.cmpf ogt, %295, %296 : vector<8x32xf32>
    %298 = vector.extract_strided_slice %293 {offsets = [0, 0], sizes = [8, 128], strides = [1, 1]} : vector<8x384xf32> to vector<8x128xf32>
    %299 = vector.extract_strided_slice %5 {offsets = [32, 0], sizes = [8, 128], strides = [1, 1]} : vector<48x128xf32> to vector<8x128xf32>
    %300 = arith.addf %298, %299 : vector<8x128xf32>
    %301 = arith.negf %300 : vector<8x128xf32>
    %302 = math.exp %301 : vector<8x128xf32>
    %cst_76 = arith.constant 1.000000e+00 : f32
    %303 = vector.broadcast %cst_76 : f32 to vector<8x128xf32>
    %304 = arith.addf %303, %302 : vector<8x128xf32>
    %305 = arith.divf %303, %304 : vector<8x128xf32>
    %306 = math.tanh %300 : vector<8x128xf32>
    %307 = vector.extract_strided_slice %305 {offsets = [0, 0], sizes = [8, 32], strides = [1, 1]} : vector<8x128xf32> to vector<8x32xf32>
    %308 = vector.extract_strided_slice %305 {offsets = [0, 32], sizes = [8, 32], strides = [1, 1]} : vector<8x128xf32> to vector<8x32xf32>
    %309 = vector.extract_strided_slice %306 {offsets = [0, 64], sizes = [8, 32], strides = [1, 1]} : vector<8x128xf32> to vector<8x32xf32>
    %310 = vector.extract_strided_slice %305 {offsets = [0, 96], sizes = [8, 32], strides = [1, 1]} : vector<8x128xf32> to vector<8x32xf32>
    %311 = arith.mulf %308, %288 : vector<8x32xf32>
    %312 = arith.mulf %307, %309 : vector<8x32xf32>
    %313 = arith.addf %311, %312 : vector<8x32xf32>
    %314 = math.tanh %313 : vector<8x32xf32>
    %315 = arith.mulf %310, %314 : vector<8x32xf32>
    %316 = vector.extract_strided_slice %293 {offsets = [0, 128], sizes = [8, 128], strides = [1, 1]} : vector<8x384xf32> to vector<8x128xf32>
    %317 = vector.extract_strided_slice %27 {offsets = [32, 0], sizes = [8, 128], strides = [1, 1]} : vector<48x128xf32> to vector<8x128xf32>
    %318 = arith.addf %316, %317 : vector<8x128xf32>
    %319 = arith.negf %318 : vector<8x128xf32>
    %320 = math.exp %319 : vector<8x128xf32>
    %cst_77 = arith.constant 1.000000e+00 : f32
    %321 = vector.broadcast %cst_77 : f32 to vector<8x128xf32>
    %322 = arith.addf %321, %320 : vector<8x128xf32>
    %323 = arith.divf %321, %322 : vector<8x128xf32>
    %324 = math.tanh %318 : vector<8x128xf32>
    %325 = vector.extract_strided_slice %323 {offsets = [0, 0], sizes = [8, 32], strides = [1, 1]} : vector<8x128xf32> to vector<8x32xf32>
    %326 = vector.extract_strided_slice %323 {offsets = [0, 32], sizes = [8, 32], strides = [1, 1]} : vector<8x128xf32> to vector<8x32xf32>
    %327 = vector.extract_strided_slice %324 {offsets = [0, 64], sizes = [8, 32], strides = [1, 1]} : vector<8x128xf32> to vector<8x32xf32>
    %328 = vector.extract_strided_slice %323 {offsets = [0, 96], sizes = [8, 32], strides = [1, 1]} : vector<8x128xf32> to vector<8x32xf32>
    %329 = arith.mulf %326, %290 : vector<8x32xf32>
    %330 = arith.mulf %325, %327 : vector<8x32xf32>
    %331 = arith.addf %329, %330 : vector<8x32xf32>
    %332 = math.tanh %331 : vector<8x32xf32>
    %333 = arith.mulf %328, %332 : vector<8x32xf32>
    %c3_78 = arith.constant 3 : index
    %c0_79 = arith.constant 0 : index
    %c0_80 = arith.constant 0 : index
    %334 = vector.load %arg14[%c3_78, %c0_79, %c0_80] : memref<6x8x32xf32, #tpu.memory_space<vmem>>, vector<1x8x32xf32>
    %335 = vector.shape_cast %334 : vector<1x8x32xf32> to vector<8x32xf32>
    %cst_81 = arith.constant 5.000000e-01 : f32
    %336 = vector.broadcast %cst_81 : f32 to vector<8x32xf32>
    %337 = arith.cmpf ogt, %335, %336 : vector<8x32xf32>
    %338 = vector.extract_strided_slice %293 {offsets = [0, 256], sizes = [8, 128], strides = [1, 1]} : vector<8x384xf32> to vector<8x128xf32>
    %339 = vector.broadcast %29 : vector<1x128xf32> to vector<8x128xf32>
    %340 = arith.addf %338, %339 : vector<8x128xf32>
    %341 = arith.negf %340 : vector<8x128xf32>
    %342 = math.exp %341 : vector<8x128xf32>
    %cst_82 = arith.constant 1.000000e+00 : f32
    %343 = vector.broadcast %cst_82 : f32 to vector<8x128xf32>
    %344 = arith.addf %343, %342 : vector<8x128xf32>
    %345 = arith.divf %343, %344 : vector<8x128xf32>
    %346 = math.tanh %340 : vector<8x128xf32>
    %347 = vector.extract_strided_slice %345 {offsets = [0, 0], sizes = [8, 32], strides = [1, 1]} : vector<8x128xf32> to vector<8x32xf32>
    %348 = vector.extract_strided_slice %345 {offsets = [0, 32], sizes = [8, 32], strides = [1, 1]} : vector<8x128xf32> to vector<8x32xf32>
    %349 = vector.extract_strided_slice %346 {offsets = [0, 64], sizes = [8, 32], strides = [1, 1]} : vector<8x128xf32> to vector<8x32xf32>
    %350 = vector.extract_strided_slice %345 {offsets = [0, 96], sizes = [8, 32], strides = [1, 1]} : vector<8x128xf32> to vector<8x32xf32>
    %351 = arith.mulf %348, %286 : vector<8x32xf32>
    %352 = arith.mulf %347, %349 : vector<8x32xf32>
    %353 = arith.addf %351, %352 : vector<8x32xf32>
    %354 = math.tanh %353 : vector<8x32xf32>
    %355 = arith.mulf %350, %354 : vector<8x32xf32>
    %356 = arith.select %337, %355, %285 : vector<8x32xi1>, vector<8x32xf32>
    %357 = arith.select %337, %353, %286 : vector<8x32xi1>, vector<8x32xf32>
    %358 = arith.select %297, %315, %287 : vector<8x32xi1>, vector<8x32xf32>
    %359 = arith.select %297, %313, %288 : vector<8x32xi1>, vector<8x32xf32>
    %360 = arith.select %297, %333, %289 : vector<8x32xi1>, vector<8x32xf32>
    %361 = arith.select %297, %331, %290 : vector<8x32xi1>, vector<8x32xf32>
    %362 = tpu.concatenate %358, %360, %356 in 1 : vector<8x32xf32>, vector<8x32xf32>, vector<8x32xf32> -> vector<8x96xf32>
    %363 = arith.truncf %362 : vector<8x96xf32> to vector<8x96xbf16>
    %cst_83 = arith.constant dense<0.000000e+00> : vector<8x384xf32>
    %364 = tpu.matmul %363, %28, %cst_83 {dimension_numbers = #tpu.dot_dimension_numbers<[1], [0], [0], [1], [0, 0, 1, 1], [], []>} : vector<8x96xbf16>, vector<96x384xbf16>, vector<8x384xf32> -> vector<8x384xf32>
    %c5 = arith.constant 5 : index
    %c0_84 = arith.constant 0 : index
    %c0_85 = arith.constant 0 : index
    %365 = vector.load %arg14[%c5, %c0_84, %c0_85] : memref<6x8x32xf32, #tpu.memory_space<vmem>>, vector<1x8x32xf32>
    %366 = vector.shape_cast %365 : vector<1x8x32xf32> to vector<8x32xf32>
    %cst_86 = arith.constant 5.000000e-01 : f32
    %367 = vector.broadcast %cst_86 : f32 to vector<8x32xf32>
    %368 = arith.cmpf ogt, %366, %367 : vector<8x32xf32>
    %369 = vector.extract_strided_slice %364 {offsets = [0, 0], sizes = [8, 128], strides = [1, 1]} : vector<8x384xf32> to vector<8x128xf32>
    %370 = vector.extract_strided_slice %5 {offsets = [40, 0], sizes = [8, 128], strides = [1, 1]} : vector<48x128xf32> to vector<8x128xf32>
    %371 = arith.addf %369, %370 : vector<8x128xf32>
    %372 = arith.negf %371 : vector<8x128xf32>
    %373 = math.exp %372 : vector<8x128xf32>
    %cst_87 = arith.constant 1.000000e+00 : f32
    %374 = vector.broadcast %cst_87 : f32 to vector<8x128xf32>
    %375 = arith.addf %374, %373 : vector<8x128xf32>
    %376 = arith.divf %374, %375 : vector<8x128xf32>
    %377 = math.tanh %371 : vector<8x128xf32>
    %378 = vector.extract_strided_slice %376 {offsets = [0, 0], sizes = [8, 32], strides = [1, 1]} : vector<8x128xf32> to vector<8x32xf32>
    %379 = vector.extract_strided_slice %376 {offsets = [0, 32], sizes = [8, 32], strides = [1, 1]} : vector<8x128xf32> to vector<8x32xf32>
    %380 = vector.extract_strided_slice %377 {offsets = [0, 64], sizes = [8, 32], strides = [1, 1]} : vector<8x128xf32> to vector<8x32xf32>
    %381 = vector.extract_strided_slice %376 {offsets = [0, 96], sizes = [8, 32], strides = [1, 1]} : vector<8x128xf32> to vector<8x32xf32>
    %382 = arith.mulf %379, %359 : vector<8x32xf32>
    %383 = arith.mulf %378, %380 : vector<8x32xf32>
    %384 = arith.addf %382, %383 : vector<8x32xf32>
    %385 = math.tanh %384 : vector<8x32xf32>
    %386 = arith.mulf %381, %385 : vector<8x32xf32>
    %387 = vector.extract_strided_slice %364 {offsets = [0, 128], sizes = [8, 128], strides = [1, 1]} : vector<8x384xf32> to vector<8x128xf32>
    %388 = vector.extract_strided_slice %27 {offsets = [40, 0], sizes = [8, 128], strides = [1, 1]} : vector<48x128xf32> to vector<8x128xf32>
    %389 = arith.addf %387, %388 : vector<8x128xf32>
    %390 = arith.negf %389 : vector<8x128xf32>
    %391 = math.exp %390 : vector<8x128xf32>
    %cst_88 = arith.constant 1.000000e+00 : f32
    %392 = vector.broadcast %cst_88 : f32 to vector<8x128xf32>
    %393 = arith.addf %392, %391 : vector<8x128xf32>
    %394 = arith.divf %392, %393 : vector<8x128xf32>
    %395 = math.tanh %389 : vector<8x128xf32>
    %396 = vector.extract_strided_slice %394 {offsets = [0, 0], sizes = [8, 32], strides = [1, 1]} : vector<8x128xf32> to vector<8x32xf32>
    %397 = vector.extract_strided_slice %394 {offsets = [0, 32], sizes = [8, 32], strides = [1, 1]} : vector<8x128xf32> to vector<8x32xf32>
    %398 = vector.extract_strided_slice %395 {offsets = [0, 64], sizes = [8, 32], strides = [1, 1]} : vector<8x128xf32> to vector<8x32xf32>
    %399 = vector.extract_strided_slice %394 {offsets = [0, 96], sizes = [8, 32], strides = [1, 1]} : vector<8x128xf32> to vector<8x32xf32>
    %400 = arith.mulf %397, %361 : vector<8x32xf32>
    %401 = arith.mulf %396, %398 : vector<8x32xf32>
    %402 = arith.addf %400, %401 : vector<8x32xf32>
    %403 = math.tanh %402 : vector<8x32xf32>
    %404 = arith.mulf %399, %403 : vector<8x32xf32>
    %c4_89 = arith.constant 4 : index
    %c0_90 = arith.constant 0 : index
    %c0_91 = arith.constant 0 : index
    %405 = vector.load %arg14[%c4_89, %c0_90, %c0_91] : memref<6x8x32xf32, #tpu.memory_space<vmem>>, vector<1x8x32xf32>
    %406 = vector.shape_cast %405 : vector<1x8x32xf32> to vector<8x32xf32>
    %cst_92 = arith.constant 5.000000e-01 : f32
    %407 = vector.broadcast %cst_92 : f32 to vector<8x32xf32>
    %408 = arith.cmpf ogt, %406, %407 : vector<8x32xf32>
    %409 = vector.extract_strided_slice %364 {offsets = [0, 256], sizes = [8, 128], strides = [1, 1]} : vector<8x384xf32> to vector<8x128xf32>
    %410 = vector.broadcast %29 : vector<1x128xf32> to vector<8x128xf32>
    %411 = arith.addf %409, %410 : vector<8x128xf32>
    %412 = arith.negf %411 : vector<8x128xf32>
    %413 = math.exp %412 : vector<8x128xf32>
    %cst_93 = arith.constant 1.000000e+00 : f32
    %414 = vector.broadcast %cst_93 : f32 to vector<8x128xf32>
    %415 = arith.addf %414, %413 : vector<8x128xf32>
    %416 = arith.divf %414, %415 : vector<8x128xf32>
    %417 = math.tanh %411 : vector<8x128xf32>
    %418 = vector.extract_strided_slice %416 {offsets = [0, 0], sizes = [8, 32], strides = [1, 1]} : vector<8x128xf32> to vector<8x32xf32>
    %419 = vector.extract_strided_slice %416 {offsets = [0, 32], sizes = [8, 32], strides = [1, 1]} : vector<8x128xf32> to vector<8x32xf32>
    %420 = vector.extract_strided_slice %417 {offsets = [0, 64], sizes = [8, 32], strides = [1, 1]} : vector<8x128xf32> to vector<8x32xf32>
    %421 = vector.extract_strided_slice %416 {offsets = [0, 96], sizes = [8, 32], strides = [1, 1]} : vector<8x128xf32> to vector<8x32xf32>
    %422 = arith.mulf %419, %357 : vector<8x32xf32>
    %423 = arith.mulf %418, %420 : vector<8x32xf32>
    %424 = arith.addf %422, %423 : vector<8x32xf32>
    %425 = math.tanh %424 : vector<8x32xf32>
    %426 = arith.mulf %421, %425 : vector<8x32xf32>
    %427 = arith.select %408, %426, %356 : vector<8x32xi1>, vector<8x32xf32>
    %428 = arith.select %408, %424, %357 : vector<8x32xi1>, vector<8x32xf32>
    %429 = arith.select %368, %386, %358 : vector<8x32xi1>, vector<8x32xf32>
    %430 = arith.select %368, %404, %360 : vector<8x32xi1>, vector<8x32xf32>
    %431 = tpu.concatenate %429, %427 in 1 : vector<8x32xf32>, vector<8x32xf32> -> vector<8x64xf32>
    %432 = arith.truncf %431 : vector<8x64xf32> to vector<8x64xbf16>
    %c0_94 = arith.constant 0 : index
    %c0_95 = arith.constant 0 : index
    %433 = vector.load %arg12[%c0_94, %c0_95] : memref<64x128xbf16, #tpu.memory_space<vmem>>, vector<64x128xbf16>
    %cst_96 = arith.constant dense<0.000000e+00> : vector<8x128xf32>
    %434 = tpu.matmul %432, %433, %cst_96 {dimension_numbers = #tpu.dot_dimension_numbers<[1], [0], [0], [1], [0, 0, 1, 1], [], []>} : vector<8x64xbf16>, vector<64x128xbf16>, vector<8x128xf32> -> vector<8x128xf32>
    %435 = vector.broadcast %29 : vector<1x128xf32> to vector<8x128xf32>
    %436 = arith.addf %434, %435 : vector<8x128xf32>
    %437 = arith.negf %436 : vector<8x128xf32>
    %438 = math.exp %437 : vector<8x128xf32>
    %cst_97 = arith.constant 1.000000e+00 : f32
    %439 = vector.broadcast %cst_97 : f32 to vector<8x128xf32>
    %440 = arith.addf %439, %438 : vector<8x128xf32>
    %441 = arith.divf %439, %440 : vector<8x128xf32>
    %442 = math.tanh %436 : vector<8x128xf32>
    %443 = vector.extract_strided_slice %441 {offsets = [0, 0], sizes = [8, 32], strides = [1, 1]} : vector<8x128xf32> to vector<8x32xf32>
    %444 = vector.extract_strided_slice %441 {offsets = [0, 32], sizes = [8, 32], strides = [1, 1]} : vector<8x128xf32> to vector<8x32xf32>
    %445 = vector.extract_strided_slice %442 {offsets = [0, 64], sizes = [8, 32], strides = [1, 1]} : vector<8x128xf32> to vector<8x32xf32>
    %446 = vector.extract_strided_slice %441 {offsets = [0, 96], sizes = [8, 32], strides = [1, 1]} : vector<8x128xf32> to vector<8x32xf32>
    %447 = arith.mulf %444, %428 : vector<8x32xf32>
    %448 = arith.mulf %443, %445 : vector<8x32xf32>
    %449 = arith.addf %447, %448 : vector<8x32xf32>
    %450 = math.tanh %449 : vector<8x32xf32>
    %451 = arith.mulf %446, %450 : vector<8x32xf32>
    %c5_98 = arith.constant 5 : index
    %c0_99 = arith.constant 0 : index
    %c0_100 = arith.constant 0 : index
    %452 = vector.load %arg14[%c5_98, %c0_99, %c0_100] : memref<6x8x32xf32, #tpu.memory_space<vmem>>, vector<1x8x32xf32>
    %453 = vector.shape_cast %452 : vector<1x8x32xf32> to vector<8x32xf32>
    %cst_101 = arith.constant 5.000000e-01 : f32
    %454 = vector.broadcast %cst_101 : f32 to vector<8x32xf32>
    %455 = arith.cmpf ogt, %453, %454 : vector<8x32xf32>
    %456 = arith.select %455, %451, %427 : vector<8x32xi1>, vector<8x32xf32>
    %c0_102 = arith.constant 0 : index
    %c0_103 = arith.constant 0 : index
    %457 = vector.load %arg15[%c0_102, %c0_103] : memref<8x32xf32, #tpu.memory_space<vmem>>, vector<8x32xf32>
    tpu.vector_store %arg15[%c0_102, %c0_103], %456 {strides = array<i32>} : memref<8x32xf32, #tpu.memory_space<vmem>>, vector<8x32xf32>,
    %c0_104 = arith.constant 0 : index
    %c0_105 = arith.constant 0 : index
    %458 = vector.load %arg16[%c0_104, %c0_105] : memref<8x32xf32, #tpu.memory_space<vmem>>, vector<8x32xf32>
    tpu.vector_store %arg16[%c0_104, %c0_105], %430 {strides = array<i32>} : memref<8x32xf32, #tpu.memory_space<vmem>>, vector<8x32xf32>,
    %459 = arith.subf %456, %430 : vector<8x32xf32>
    %460 = math.absf %459 : vector<8x32xf32>
    %cst_106 = arith.constant dense<0.000000e+00> : vector<8xf32>
    %461 = vector.multi_reduction <add>, %460, %cst_106 [1] : vector<8x32xf32> to vector<8xf32>
    %462 = vector.shape_cast %461 : vector<8xf32> to vector<8x1xf32>
    %cst_107 = arith.constant 0.000000e+00 : f32
    %463 = vector.broadcast %cst_107 : f32 to vector<8x1xf32>
    %464 = arith.subf %463, %462 : vector<8x1xf32>
    %465 = math.exp %464 : vector<8x1xf32>
    %c0_108 = arith.constant 0 : index
    %c0_109 = arith.constant 0 : index
    %466 = vector.load %arg17[%c0_108, %c0_109] : memref<8x1xf32, #tpu.memory_space<vmem>>, vector<8x1xf32>
    tpu.vector_store %arg17[%c0_108, %c0_109], %465 {strides = array<i32>} : memref<8x1xf32, #tpu.memory_space<vmem>>, vector<8x1xf32>,
    return
  }
}

</mosaic_0001>

<llo_original>
// kernel: tile.8
$region0: #{tile.8}
  #allocation0 [shape = 's32[1]{0}', space=sflag, size = 0x4, scoped, tag = 'scoped memory for tile.8']
  %s0 = inlined_call_operand.vmem [shape: f32[8], index: 0, kind: input, shape index: {}]
  %s1 = inlined_call_operand.vmem [shape: f32[9,8], index: 1, kind: output, shape index: {}]
  // Predicated region
  $region2: #{tile.8} parent=0 // pred_check
    _
  $region3: #{tile.8} parent=0 // pred_check_branch
    %3 = sbr.rel (0) target = $region5
  $region4: #{tile.8} parent=0 // pred_region
    _
  $region5: #{tile.8} parent=0 // pred_fallthru
    _
  %v4 = vld [vmem:[%s0] ss:$0 sm:$0xff]
  %5 = vst [vmem:[%s1] sm:$0xff] %v4
  %s6 = scalar_lea.vmem %s1, 8
  %7 = vst [vmem:[%s6] sm:$0xff] %v4

// kernel: tile.9
$region0: #{tile.9}
  %s0 = inlined_call_operand.vmem [shape: f32[9,8], index: 0, kind: input, shape index: {}]
  %s1 = inlined_call_operand.vmem [shape: f32[1,72], index: 1, kind: output, shape index: {}]
  $region1: #{tile.9} parent=0
    #allocation0 [shape = 'u8[4096]{0}', space=vmem, size = 0x1000, scoped, tag = 'scoped mem for output reshape']
    %v2 = vld [vmem:[%s0] sm:$0x1]
    %vm3 = vcmask 64512
    %4 = vst.msk [vmem:[#allocation0] sm:$0x1] %vm3, %v2
    %s5 = scalar_lea.vmem %s0, 8
    %v6 = vld [vmem:[%s5] sm:$0x1]
    %7 = vrot.lane.b32.xlu0 %v6, 64
    %v8 = vpop.permute.xlu0 %7
    %vm9 = vcmask 589312
    %10 = vst.msk [vmem:[#allocation0] sm:$0x1] %vm9, %v8
    %s11 = scalar_lea.vmem %s0, 7
    %v12 = vld [vmem:[%s11] sm:$0x1]
    %13 = vrot.lane.b32.xlu0 %v12, 56
    %v14 = vpop.permute.xlu0 %13
    %vm15 = vcmask 523712
    %16 = vst.msk [vmem:[#allocation0] sm:$0x1] %vm15, %v14
    %s17 = scalar_lea.vmem %s0, 6
    %v18 = vld [vmem:[%s17] sm:$0x1]
    %19 = vrot.lane.b32.xlu0 %v18, 48
    %v20 = vpop.permute.xlu0 %19
    %vm21 = vcmask 458112
    %22 = vst.msk [vmem:[#allocation0] sm:$0x1] %vm21, %v20
    %s23 = scalar_lea.vmem %s0, 5
    %v24 = vld [vmem:[%s23] sm:$0x1]
    %25 = vrot.lane.b32.xlu0 %v24, 40
    %v26 = vpop.permute.xlu0 %25
    %vm27 = vcmask 392512
    %28 = vst.msk [vmem:[#allocation0] sm:$0x1] %vm27, %v26
    %s29 = scalar_lea.vmem %s0, 4
    %v30 = vld [vmem:[%s29] sm:$0x1]
    %31 = vrot.lane.b32.xlu0 %v30, 32
    %v32 = vpop.permute.xlu0 %31
    %vm33 = vcmask 326912
    %34 = vst.msk [vmem:[#allocation0] sm:$0x1] %vm33, %v32
    %s35 = scalar_lea.vmem %s0, 3
    %v36 = vld [vmem:[%s35] sm:$0x1]
    %37 = vrot.lane.b32.xlu0 %v36, 24
    %v38 = vpop.permute.xlu0 %37
    %vm39 = vcmask 261312
    %40 = vst.msk [vmem:[#allocation0] sm:$0x1] %vm39, %v38
    %s41 = scalar_lea.vmem %s0, 2
    %v42 = vld [vmem:[%s41] sm:$0x1]
    %43 = vrot.lane.b32.xlu0 %v42, 16
    %v44 = vpop.permute.xlu0 %43
    %vm45 = vcmask 195712
    %46 = vst.msk [vmem:[#allocation0] sm:$0x1] %vm45, %v44
    %s47 = scalar_lea.vmem %s0, 1
    %v48 = vld [vmem:[%s47] sm:$0x1]
    %49 = vrot.lane.b32.xlu0 %v48, 8
    %v50 = vpop.permute.xlu0 %49
    %vm51 = vcmask 130112
    %52 = vst.msk [vmem:[#allocation0] sm:$0x1] %vm51, %v50
    %s54 = sshll.u32 1, 1
    %s55 = ssub.s32 %s54, 1
    %v57 = vld [vmem:[#allocation0] sm:%s55]
    %s58 = sshll.u32 1, 1
    %s59 = ssub.s32 %s58, 1
    %60 = vst [vmem:[%s1] sm:%s59] %v57

// kernel: model_text_eeg_forward.1
$region0: #{model_text_eeg_forward.1}
  #allocation0 [shape = 'u32[]', space=smem, size = 0x4, offset = 0x4, fixed_abs, tag = 'smem constant byte address 0x4 - core index']
  #allocation1 [shape = 'u32[144,128]{1,0:T(1,128)}', space=vmem, size = 0x12000, scoped, tag = 'internal scratch']
  %s0 = inlined_call_operand.vmem [shape: f32[48,32], index: 0, kind: input, shape index: {}]
  %s1 = inlined_call_operand.vmem [shape: f32[32,128], index: 1, kind: input, shape index: {}]
  %s2 = inlined_call_operand.vmem [shape: f32[1,128], index: 2, kind: input, shape index: {}]
  %s3 = inlined_call_operand.vmem [shape: f32[48,72], index: 3, kind: input, shape index: {}]
  %s4 = inlined_call_operand.vmem [shape: f32[72,72], index: 4, kind: input, shape index: {}]
  %s5 = inlined_call_operand.vmem [shape: f32[1,72], index: 5, kind: input, shape index: {}]
  %s6 = inlined_call_operand.vmem [shape: f32[72,128], index: 6, kind: input, shape index: {}]
  %s7 = inlined_call_operand.vmem [shape: f32[1,128], index: 7, kind: input, shape index: {}]
  %s8 = inlined_call_operand.vmem [shape: f32[48,48], index: 8, kind: input, shape index: {}]
  %s9 = inlined_call_operand.vmem [shape: f32[128,128], index: 9, kind: input, shape index: {}]
  %s10 = inlined_call_operand.vmem [shape: f32[1,128], index: 10, kind: input, shape index: {}]
  %s11 = inlined_call_operand.vmem [shape: bf16[96,384], index: 11, kind: input, shape index: {}]
  %s12 = inlined_call_operand.vmem [shape: bf16[64,128], index: 12, kind: input, shape index: {}]
  %s13 = inlined_call_operand.vmem [shape: f32[1,128], index: 13, kind: input, shape index: {}]
  %s14 = inlined_call_operand.vmem [shape: f32[6,8,32], index: 14, kind: input, shape index: {}]
  %s15 = inlined_call_operand.vmem [shape: f32[8,32], index: 15, kind: output, shape index: {0}]
  %s16 = inlined_call_operand.vmem [shape: f32[8,32], index: 16, kind: output, shape index: {1}]
  %s17 = inlined_call_operand.vmem [shape: f32[8,1], index: 17, kind: output, shape index: {2}]
  %18 = xla_tuple %s15, %s16, %s17
  %s19 = sld [smem:[#allocation0]]
  $region86: #{model_text_eeg_forward.1} parent=0
    _
  %s21 = ssub.s32 1, %s19
  %s22 = scalar_select 0, %s21, %s19
  // Predicated region
  $region2: #{model_text_eeg_forward.1} parent=0 // pred_check
    _
  $region3: #{model_text_eeg_forward.1} parent=0 // pred_check_branch
    %24 = sbr.rel (0) target = $region5
  $region4: #{model_text_eeg_forward.1} parent=0 // pred_region
    _
  $region5: #{model_text_eeg_forward.1} parent=0 // pred_fallthru
    _
  // Predicated region
  $region6: #{model_text_eeg_forward.1} parent=0 // pred_check
    _
  $region7: #{model_text_eeg_forward.1} parent=0 // pred_check_branch
    %26 = sbr.rel (0) target = $region9
  $region8: #{model_text_eeg_forward.1} parent=0 // pred_region
    _
  $region9: #{model_text_eeg_forward.1} parent=0 // pred_fallthru
    _
  // Predicated region
  $region10: #{model_text_eeg_forward.1} parent=0 // pred_check
    _
  $region11: #{model_text_eeg_forward.1} parent=0 // pred_check_branch
    %28 = sbr.rel (0) target = $region13
  $region12: #{model_text_eeg_forward.1} parent=0 // pred_region
    _
  $region13: #{model_text_eeg_forward.1} parent=0 // pred_fallthru
    _
  // Predicated region
  $region14: #{model_text_eeg_forward.1} parent=0 // pred_check
    _
  $region15: #{model_text_eeg_forward.1} parent=0 // pred_check_branch
    %30 = sbr.rel (0) target = $region17
  $region16: #{model_text_eeg_forward.1} parent=0 // pred_region
    _
  $region17: #{model_text_eeg_forward.1} parent=0 // pred_fallthru
    _
  // Predicated region
  $region18: #{model_text_eeg_forward.1} parent=0 // pred_check
    _
  $region19: #{model_text_eeg_forward.1} parent=0 // pred_check_branch
    %32 = sbr.rel (0) target = $region21
  $region20: #{model_text_eeg_forward.1} parent=0 // pred_region
    _
  $region21: #{model_text_eeg_forward.1} parent=0 // pred_fallthru
    _
  // Predicated region
  $region22: #{model_text_eeg_forward.1} parent=0 // pred_check
    _
  $region23: #{model_text_eeg_forward.1} parent=0 // pred_check_branch
    %34 = sbr.rel (0) target = $region25
  $region24: #{model_text_eeg_forward.1} parent=0 // pred_region
    _
  $region25: #{model_text_eeg_forward.1} parent=0 // pred_fallthru
    _
  // Predicated region
  $region26: #{model_text_eeg_forward.1} parent=0 // pred_check
    _
  $region27: #{model_text_eeg_forward.1} parent=0 // pred_check_branch
    %36 = sbr.rel (0) target = $region29
  $region28: #{model_text_eeg_forward.1} parent=0 // pred_region
    _
  $region29: #{model_text_eeg_forward.1} parent=0 // pred_fallthru
    _
  // Predicated region
  $region30: #{model_text_eeg_forward.1} parent=0 // pred_check
    _
  $region31: #{model_text_eeg_forward.1} parent=0 // pred_check_branch
    %38 = sbr.rel (0) target = $region33
  $region32: #{model_text_eeg_forward.1} parent=0 // pred_region
    _
  $region33: #{model_text_eeg_forward.1} parent=0 // pred_fallthru
    _
  // Predicated region
  $region34: #{model_text_eeg_forward.1} parent=0 // pred_check
    _
  $region35: #{model_text_eeg_forward.1} parent=0 // pred_check_branch
    %40 = sbr.rel (0) target = $region37
  $region36: #{model_text_eeg_forward.1} parent=0 // pred_region
    _
  $region37: #{model_text_eeg_forward.1} parent=0 // pred_fallthru
    _
  // Predicated region
  $region38: #{model_text_eeg_forward.1} parent=0 // pred_check
    _
  $region39: #{model_text_eeg_forward.1} parent=0 // pred_check_branch
    %42 = sbr.rel (0) target = $region41
  $region40: #{model_text_eeg_forward.1} parent=0 // pred_region
    _
  $region41: #{model_text_eeg_forward.1} parent=0 // pred_fallthru
    _
  // Predicated region
  $region42: #{model_text_eeg_forward.1} parent=0 // pred_check
    _
  $region43: #{model_text_eeg_forward.1} parent=0 // pred_check_branch
    %44 = sbr.rel (0) target = $region45
  $region44: #{model_text_eeg_forward.1} parent=0 // pred_region
    _
  $region45: #{model_text_eeg_forward.1} parent=0 // pred_fallthru
    _
  // Predicated region
  $region46: #{model_text_eeg_forward.1} parent=0 // pred_check
    _
  $region47: #{model_text_eeg_forward.1} parent=0 // pred_check_branch
    %46 = sbr.rel (0) target = $region49
  $region48: #{model_text_eeg_forward.1} parent=0 // pred_region
    _
  $region49: #{model_text_eeg_forward.1} parent=0 // pred_fallthru
    _
  // Predicated region
  $region50: #{model_text_eeg_forward.1} parent=0 // pred_check
    _
  $region51: #{model_text_eeg_forward.1} parent=0 // pred_check_branch
    %48 = sbr.rel (0) target = $region53
  $region52: #{model_text_eeg_forward.1} parent=0 // pred_region
    _
  $region53: #{model_text_eeg_forward.1} parent=0 // pred_fallthru
    _
  // Predicated region
  $region54: #{model_text_eeg_forward.1} parent=0 // pred_check
    _
  $region55: #{model_text_eeg_forward.1} parent=0 // pred_check_branch
    %50 = sbr.rel (0) target = $region57
  $region56: #{model_text_eeg_forward.1} parent=0 // pred_region
    _
  $region57: #{model_text_eeg_forward.1} parent=0 // pred_fallthru
    _
  // Predicated region
  $region58: #{model_text_eeg_forward.1} parent=0 // pred_check
    _
  $region59: #{model_text_eeg_forward.1} parent=0 // pred_check_branch
    %52 = sbr.rel (0) target = $region61
  $region60: #{model_text_eeg_forward.1} parent=0 // pred_region
    _
  $region61: #{model_text_eeg_forward.1} parent=0 // pred_fallthru
    _
  %v54 = vld [vmem:[%s0] sm:$0xff]
  %v55 = vld [vmem:[%s0 + $0x8] sm:$0xff]
  %v56 = vld [vmem:[%s0 + $0x10] sm:$0xff]
  %v57 = vld [vmem:[%s0 + $0x18] sm:$0xff]
  %v58 = vld [vmem:[%s0 + $0x20] sm:$0xff]
  %v59 = vld [vmem:[%s0 + $0x28] sm:$0xff]
  %v60 = vld [vmem:[%s1] sm:$0xff]
  %v61 = vld [vmem:[%s1 + $0x8] sm:$0xff]
  %v62 = vld [vmem:[%s1 + $0x10] sm:$0xff]
  %v63 = vld [vmem:[%s1 + $0x18] sm:$0xff]
  %v64 = vld [vmem:[%s2] sm:$0x1]
  %v66 = vlaneseq
  %v67 = vshrl.u32 %v66, 7
  %v68 = vsub.s32 0, %v67
  %v69 = vrot.slane %v64, %v68
  %vm71 = vcmask 261120
  %v73 = vsel %vm71, %v54, 0
  %v76 = vsel %vm71, %v55, 0
  %v79 = vsel %vm71, %v56, 0
  %v82 = vsel %vm71, %v57, 0
  %v85 = vsel %vm71, %v58, 0
  %v88 = vsel %vm71, %v59, 0
  %90 = vmatprep.subr.mxu0 0.0
  %91 = vmatpush1.msra.mxu0 0.0
  %92 = vmatprep.subr.mxu0 0.0
  %93 = vmatpush1.msra.mxu0 0.0
  %94 = vmatprep.subr.mxu0 0.0
  %95 = vmatpush1.msra.mxu0 0.0
  %96 = vmatprep.subr.mxu0 0.0
  %97 = vmatpush1.msra.mxu0 0.0
  %98 = vmatprep.subr.mxu0 0.0
  %99 = vmatpush1.msra.mxu0 0.0
  %100 = vmatprep.subr.mxu0 0.0
  %101 = vmatpush1.msra.mxu0 0.0
  %102 = vmatprep.subr.mxu0 0.0
  %103 = vmatpush1.msra.mxu0 0.0
  %104 = vmatprep.subr.mxu0 0.0
  %105 = vmatpush1.msra.mxu0 0.0
  %106 = vmatprep.subr.mxu0 0.0
  %107 = vmatpush1.msra.mxu0 0.0
  %108 = vmatprep.subr.mxu0 0.0
  %109 = vmatpush1.msra.mxu0 0.0
  %110 = vmatprep.subr.mxu0 0.0
  %111 = vmatpush1.msra.mxu0 0.0
  %112 = vmatprep.subr.mxu0 0.0
  %113 = vmatpush1.msra.mxu0 0.0
  %114 = vmatprep.subr.mxu0 0.0
  %115 = vmatpush1.msra.mxu0 %v63
  %116 = vmatprep.subr.mxu0 0.0
  %117 = vmatpush1.msra.mxu0 %v62
  %118 = vmatprep.subr.mxu0 0.0
  %119 = vmatpush1.msra.mxu0 %v61
  %120 = vmatprep.subr.mxu0 0.0
  %121 = vmatpush1.msra.mxu0 %v60
  %122 = vmatprep.subr.mxu0 0.0
  %123 = vmatpush2.msra.mxu0 0.0
  %124 = vmatprep.subr.mxu0 0.0
  %125 = vmatpush2.msra.mxu0 0.0
  %126 = vmatprep.subr.mxu0 0.0
  %127 = vmatpush2.msra.mxu0 0.0
  %128 = vmatprep.subr.mxu0 0.0
  %129 = vmatpush2.msra.mxu0 0.0
  %130 = vmatprep.subr.mxu0 0.0
  %131 = vmatpush2.msra.mxu0 0.0
  %132 = vmatprep.subr.mxu0 0.0
  %133 = vmatpush2.msra.mxu0 0.0
  %134 = vmatprep.subr.mxu0 0.0
  %135 = vmatpush2.msra.mxu0 0.0
  %136 = vmatprep.subr.mxu0 0.0
  %137 = vmatpush2.msra.mxu0 0.0
  %138 = vmatprep.subr.mxu0 0.0
  %139 = vmatpush2.msra.mxu0 0.0
  %140 = vmatprep.subr.mxu0 0.0
  %141 = vmatpush2.msra.mxu0 0.0
  %142 = vmatprep.subr.mxu0 0.0
  %143 = vmatpush2.msra.mxu0 0.0
  %144 = vmatprep.subr.mxu0 0.0
  %145 = vmatpush2.msra.mxu0 0.0
  %146 = vmatprep.subr.mxu0 0.0
  %147 = vmatpush2.msra.mxu0 0.0
  %148 = vmatprep.subr.mxu0 0.0
  %149 = vmatpush2.msra.mxu0 0.0
  %150 = vmatprep.subr.mxu0 0.0
  %151 = vmatpush2.msra.mxu0 0.0
  %152 = vmatprep.subr.mxu0 0.0
  %153 = vmatpush2.msra.mxu0 0.0
  %154 = vmatprep.mubr.f32.mxu0 0.0
  %155 = vmatmul.mubr.f32.gmra.mxu0 %v73
  %v156 = vpop.f32.mrf.mxu0
  %v157 = vadd.f32 %v69, %v156
  %v158 = vpop.f32.mrf.mxu0
  %159 = vmatprep.mubr.f32.mxu0 0.0
  %160 = vmatmul.mubr.f32.gmra.mxu0 %v76
  %v161 = vpop.f32.mrf.mxu0
  %v162 = vadd.f32 %v69, %v161
  %v163 = vpop.f32.mrf.mxu0
  %164 = vmatprep.mubr.f32.mxu0 0.0
  %165 = vmatmul.mubr.f32.gmra.mxu0 %v79
  %v166 = vpop.f32.mrf.mxu0
  %v167 = vadd.f32 %v69, %v166
  %v168 = vpop.f32.mrf.mxu0
  %169 = vmatprep.mubr.f32.mxu0 0.0
  %170 = vmatmul.mubr.f32.gmra.mxu0 %v82
  %v171 = vpop.f32.mrf.mxu0
  %v172 = vadd.f32 %v69, %v171
  %v173 = vpop.f32.mrf.mxu0
  %174 = vmatprep.mubr.f32.mxu0 0.0
  %175 = vmatmul.mubr.f32.gmra.mxu0 %v85
  %v176 = vpop.f32.mrf.mxu0
  %v177 = vadd.f32 %v69, %v176
  %v178 = vpop.f32.mrf.mxu0
  %179 = vmatprep.mubr.f32.mxu0 0.0
  %180 = vmatmul.mubr.f32.gmra.mxu0 %v88
  %v181 = vpop.f32.mrf.mxu0
  %v182 = vadd.f32 %v69, %v181
  %v183 = vpop.f32.mrf.mxu0
  %184 = vdwg.mxu0
  %v185 = vld [vmem:[%s3] sm:$0xff]
  %v186 = vld [vmem:[%s3 + $0x8] sm:$0xff]
  %v187 = vld [vmem:[%s3 + $0x10] sm:$0xff]
  %v188 = vld [vmem:[%s3 + $0x18] sm:$0xff]
  %v189 = vld [vmem:[%s3 + $0x20] sm:$0xff]
  %v190 = vld [vmem:[%s3 + $0x28] sm:$0xff]
  %v191 = vld [vmem:[%s4] sm:$0xff]
  %v192 = vld [vmem:[%s4 + $0x8] sm:$0xff]
  %v193 = vld [vmem:[%s4 + $0x10] sm:$0xff]
  %v194 = vld [vmem:[%s4 + $0x18] sm:$0xff]
  %v195 = vld [vmem:[%s4 + $0x20] sm:$0xff]
  %v196 = vld [vmem:[%s4 + $0x28] sm:$0xff]
  %v197 = vld [vmem:[%s4 + $0x30] sm:$0xff]
  %v198 = vld [vmem:[%s4 + $0x38] sm:$0xff]
  %v199 = vld [vmem:[%s4 + $0x40] sm:$0xff]
  %v200 = vld [vmem:[%s5] sm:$0x1]
  %v202 = vlaneseq
  %v203 = vshrl.u32 %v202, 7
  %v204 = vsub.s32 0, %v203
  %v205 = vrot.slane %v200, %v204
  %vm207 = vcmask 588800
  %v209 = vsel %vm207, %v185, 0
  %v212 = vsel %vm207, %v186, 0
  %v215 = vsel %vm207, %v187, 0
  %v218 = vsel %vm207, %v188, 0
  %v221 = vsel %vm207, %v189, 0
  %v224 = vsel %vm207, %v190, 0
  %226 = vmatprep.subr.mxu0 0.0
  %227 = vmatpush1.msra.mxu0 0.0
  %228 = vmatprep.subr.mxu0 0.0
  %229 = vmatpush1.msra.mxu0 0.0
  %230 = vmatprep.subr.mxu0 0.0
  %231 = vmatpush1.msra.mxu0 0.0
  %232 = vmatprep.subr.mxu0 0.0
  %233 = vmatpush1.msra.mxu0 0.0
  %234 = vmatprep.subr.mxu0 0.0
  %235 = vmatpush1.msra.mxu0 0.0
  %236 = vmatprep.subr.mxu0 0.0
  %237 = vmatpush1.msra.mxu0 0.0
  %238 = vmatprep.subr.mxu0 0.0
  %239 = vmatpush1.msra.mxu0 0.0
  %240 = vmatprep.subr.mxu0 0.0
  %241 = vmatpush1.msra.mxu0 %v199
  %242 = vmatprep.subr.mxu0 0.0
  %243 = vmatpush1.msra.mxu0 %v198
  %244 = vmatprep.subr.mxu0 0.0
  %245 = vmatpush1.msra.mxu0 %v197
  %246 = vmatprep.subr.mxu0 0.0
  %247 = vmatpush1.msra.mxu0 %v196
  %248 = vmatprep.subr.mxu0 0.0
  %249 = vmatpush1.msra.mxu0 %v195
  %250 = vmatprep.subr.mxu0 0.0
  %251 = vmatpush1.msra.mxu0 %v194
  %252 = vmatprep.subr.mxu0 0.0
  %253 = vmatpush1.msra.mxu0 %v193
  %254 = vmatprep.subr.mxu0 0.0
  %255 = vmatpush1.msra.mxu0 %v192
  %256 = vmatprep.subr.mxu0 0.0
  %257 = vmatpush1.msra.mxu0 %v191
  %258 = vmatprep.subr.mxu0 0.0
  %259 = vmatpush2.msra.mxu0 0.0
  %260 = vmatprep.subr.mxu0 0.0
  %261 = vmatpush2.msra.mxu0 0.0
  %262 = vmatprep.subr.mxu0 0.0
  %263 = vmatpush2.msra.mxu0 0.0
  %264 = vmatprep.subr.mxu0 0.0
  %265 = vmatpush2.msra.mxu0 0.0
  %266 = vmatprep.subr.mxu0 0.0
  %267 = vmatpush2.msra.mxu0 0.0
  %268 = vmatprep.subr.mxu0 0.0
  %269 = vmatpush2.msra.mxu0 0.0
  %270 = vmatprep.subr.mxu0 0.0
  %271 = vmatpush2.msra.mxu0 0.0
  %272 = vmatprep.subr.mxu0 0.0
  %273 = vmatpush2.msra.mxu0 0.0
  %274 = vmatprep.subr.mxu0 0.0
  %275 = vmatpush2.msra.mxu0 0.0
  %276 = vmatprep.subr.mxu0 0.0
  %277 = vmatpush2.msra.mxu0 0.0
  %278 = vmatprep.subr.mxu0 0.0
  %279 = vmatpush2.msra.mxu0 0.0
  %280 = vmatprep.subr.mxu0 0.0
  %281 = vmatpush2.msra.mxu0 0.0
  %282 = vmatprep.subr.mxu0 0.0
  %283 = vmatpush2.msra.mxu0 0.0
  %284 = vmatprep.subr.mxu0 0.0
  %285 = vmatpush2.msra.mxu0 0.0
  %286 = vmatprep.subr.mxu0 0.0
  %287 = vmatpush2.msra.mxu0 0.0
  %288 = vmatprep.subr.mxu0 0.0
  %289 = vmatpush2.msra.mxu0 0.0
  %290 = vmatprep.mubr.f32.mxu0 0.0
  %291 = vmatmul.mubr.f32.gmra.mxu0 %v209
  %v292 = vpop.f32.mrf.mxu0
  %v293 = vadd.f32 %v205, %v292
  %v294 = vpop.f32.mrf.mxu0
  %295 = vmatprep.mubr.f32.mxu0 0.0
  %296 = vmatmul.mubr.f32.gmra.mxu0 %v212
  %v297 = vpop.f32.mrf.mxu0
  %v298 = vadd.f32 %v205, %v297
  %v299 = vpop.f32.mrf.mxu0
  %300 = vmatprep.mubr.f32.mxu0 0.0
  %301 = vmatmul.mubr.f32.gmra.mxu0 %v215
  %v302 = vpop.f32.mrf.mxu0
  %v303 = vadd.f32 %v205, %v302
  %v304 = vpop.f32.mrf.mxu0
  %305 = vmatprep.mubr.f32.mxu0 0.0
  %306 = vmatmul.mubr.f32.gmra.mxu0 %v218
  %v307 = vpop.f32.mrf.mxu0
  %v308 = vadd.f32 %v205, %v307
  %v309 = vpop.f32.mrf.mxu0
  %310 = vmatprep.mubr.f32.mxu0 0.0
  %311 = vmatmul.mubr.f32.gmra.mxu0 %v221
  %v312 = vpop.f32.mrf.mxu0
  %v313 = vadd.f32 %v205, %v312
  %v314 = vpop.f32.mrf.mxu0
  %315 = vmatprep.mubr.f32.mxu0 0.0
  %316 = vmatmul.mubr.f32.gmra.mxu0 %v224
  %v317 = vpop.f32.mrf.mxu0
  %v318 = vadd.f32 %v205, %v317
  %v319 = vpop.f32.mrf.mxu0
  %320 = vdwg.mxu0
  %v321 = vmax.f32 %v293, 0.0
  %v322 = vmax.f32 %v298, 0.0
  %v323 = vmax.f32 %v303, 0.0
  %v324 = vmax.f32 %v308, 0.0
  %v325 = vmax.f32 %v313, 0.0
  %v326 = vmax.f32 %v318, 0.0
  %v327 = vld [vmem:[%s6] sm:$0xff]
  %v328 = vld [vmem:[%s6 + $0x8] sm:$0xff]
  %v329 = vld [vmem:[%s6 + $0x10] sm:$0xff]
  %v330 = vld [vmem:[%s6 + $0x18] sm:$0xff]
  %v331 = vld [vmem:[%s6 + $0x20] sm:$0xff]
  %v332 = vld [vmem:[%s6 + $0x28] sm:$0xff]
  %v333 = vld [vmem:[%s6 + $0x30] sm:$0xff]
  %v334 = vld [vmem:[%s6 + $0x38] sm:$0xff]
  %v335 = vld [vmem:[%s6 + $0x40] sm:$0xff]
  %v336 = vld [vmem:[%s7] sm:$0x1]
  %v338 = vlaneseq
  %v339 = vshrl.u32 %v338, 7
  %v340 = vsub.s32 0, %v339
  %v341 = vrot.slane %v336, %v340
  %v344 = vsel %vm207, %v321, 0
  %v347 = vsel %vm207, %v322, 0
  %v350 = vsel %vm207, %v323, 0
  %v353 = vsel %vm207, %v324, 0
  %v356 = vsel %vm207, %v325, 0
  %v359 = vsel %vm207, %v326, 0
  %361 = vmatprep.subr.mxu0 0.0
  %362 = vmatpush1.msra.mxu0 0.0
  %363 = vmatprep.subr.mxu0 0.0
  %364 = vmatpush1.msra.mxu0 0.0
  %365 = vmatprep.subr.mxu0 0.0
  %366 = vmatpush1.msra.mxu0 0.0
  %367 = vmatprep.subr.mxu0 0.0
  %368 = vmatpush1.msra.mxu0 0.0
  %369 = vmatprep.subr.mxu0 0.0
  %370 = vmatpush1.msra.mxu0 0.0
  %371 = vmatprep.subr.mxu0 0.0
  %372 = vmatpush1.msra.mxu0 0.0
  %373 = vmatprep.subr.mxu0 0.0
  %374 = vmatpush1.msra.mxu0 0.0
  %375 = vmatprep.subr.mxu0 0.0
  %376 = vmatpush1.msra.mxu0 %v335
  %377 = vmatprep.subr.mxu0 0.0
  %378 = vmatpush1.msra.mxu0 %v334
  %379 = vmatprep.subr.mxu0 0.0
  %380 = vmatpush1.msra.mxu0 %v333
  %381 = vmatprep.subr.mxu0 0.0
  %382 = vmatpush1.msra.mxu0 %v332
  %383 = vmatprep.subr.mxu0 0.0
  %384 = vmatpush1.msra.mxu0 %v331
  %385 = vmatprep.subr.mxu0 0.0
  %386 = vmatpush1.msra.mxu0 %v330
  %387 = vmatprep.subr.mxu0 0.0
  %388 = vmatpush1.msra.mxu0 %v329
  %389 = vmatprep.subr.mxu0 0.0
  %390 = vmatpush1.msra.mxu0 %v328
  %391 = vmatprep.subr.mxu0 0.0
  %392 = vmatpush1.msra.mxu0 %v327
  %393 = vmatprep.subr.mxu0 0.0
  %394 = vmatpush2.msra.mxu0 0.0
  %395 = vmatprep.subr.mxu0 0.0
  %396 = vmatpush2.msra.mxu0 0.0
  %397 = vmatprep.subr.mxu0 0.0
  %398 = vmatpush2.msra.mxu0 0.0
  %399 = vmatprep.subr.mxu0 0.0
  %400 = vmatpush2.msra.mxu0 0.0
  %401 = vmatprep.subr.mxu0 0.0
  %402 = vmatpush2.msra.mxu0 0.0
  %403 = vmatprep.subr.mxu0 0.0
  %404 = vmatpush2.msra.mxu0 0.0
  %405 = vmatprep.subr.mxu0 0.0
  %406 = vmatpush2.msra.mxu0 0.0
  %407 = vmatprep.subr.mxu0 0.0
  %408 = vmatpush2.msra.mxu0 0.0
  %409 = vmatprep.subr.mxu0 0.0
  %410 = vmatpush2.msra.mxu0 0.0
  %411 = vmatprep.subr.mxu0 0.0
  %412 = vmatpush2.msra.mxu0 0.0
  %413 = vmatprep.subr.mxu0 0.0
  %414 = vmatpush2.msra.mxu0 0.0
  %415 = vmatprep.subr.mxu0 0.0
  %416 = vmatpush2.msra.mxu0 0.0
  %417 = vmatprep.subr.mxu0 0.0
  %418 = vmatpush2.msra.mxu0 0.0
  %419 = vmatprep.subr.mxu0 0.0
  %420 = vmatpush2.msra.mxu0 0.0
  %421 = vmatprep.subr.mxu0 0.0
  %422 = vmatpush2.msra.mxu0 0.0
  %423 = vmatprep.subr.mxu0 0.0
  %424 = vmatpush2.msra.mxu0 0.0
  %425 = vmatprep.mubr.f32.mxu0 0.0
  %426 = vmatmul.mubr.f32.gmra.mxu0 %v344
  %v427 = vpop.f32.mrf.mxu0
  %v428 = vadd.f32 %v341, %v427
  %v429 = vpop.f32.mrf.mxu0
  %430 = vmatprep.mubr.f32.mxu0 0.0
  %431 = vmatmul.mubr.f32.gmra.mxu0 %v347
  %v432 = vpop.f32.mrf.mxu0
  %v433 = vadd.f32 %v341, %v432
  %v434 = vpop.f32.mrf.mxu0
  %435 = vmatprep.mubr.f32.mxu0 0.0
  %436 = vmatmul.mubr.f32.gmra.mxu0 %v350
  %v437 = vpop.f32.mrf.mxu0
  %v438 = vadd.f32 %v341, %v437
  %v439 = vpop.f32.mrf.mxu0
  %440 = vmatprep.mubr.f32.mxu0 0.0
  %441 = vmatmul.mubr.f32.gmra.mxu0 %v353
  %v442 = vpop.f32.mrf.mxu0
  %v443 = vadd.f32 %v341, %v442
  %v444 = vpop.f32.mrf.mxu0
  %445 = vmatprep.mubr.f32.mxu0 0.0
  %446 = vmatmul.mubr.f32.gmra.mxu0 %v356
  %v447 = vpop.f32.mrf.mxu0
  %v448 = vadd.f32 %v341, %v447
  %v449 = vpop.f32.mrf.mxu0
  %450 = vmatprep.mubr.f32.mxu0 0.0
  %451 = vmatmul.mubr.f32.gmra.mxu0 %v359
  %v452 = vpop.f32.mrf.mxu0
  %v453 = vadd.f32 %v341, %v452
  %v454 = vpop.f32.mrf.mxu0
  %455 = vdwg.mxu0
  %v456 = vmax.f32 %v428, 0.0
  %v457 = vmax.f32 %v433, 0.0
  %v458 = vmax.f32 %v438, 0.0
  %v459 = vmax.f32 %v443, 0.0
  %v460 = vmax.f32 %v448, 0.0
  %v461 = vmax.f32 %v453, 0.0
  %v462 = vld [vmem:[%s8] sm:$0xff]
  %v463 = vld [vmem:[%s8 + $0x8] sm:$0xff]
  %v464 = vld [vmem:[%s8 + $0x10] sm:$0xff]
  %v465 = vld [vmem:[%s8 + $0x18] sm:$0xff]
  %v466 = vld [vmem:[%s8 + $0x20] sm:$0xff]
  %v467 = vld [vmem:[%s8 + $0x28] sm:$0xff]
  %vm468 = vcmask 392192
  %v470 = vsel %vm468, %v462, 0
  %v473 = vsel %vm468, %v463, 0
  %v476 = vsel %vm468, %v464, 0
  %v479 = vsel %vm468, %v465, 0
  %v482 = vsel %vm468, %v466, 0
  %v485 = vsel %vm468, %v467, 0
  %487 = vmatprep.subr.mxu0 0.0
  %488 = vmatpush1.msra.mxu0 0.0
  %489 = vmatprep.subr.mxu0 0.0
  %490 = vmatpush1.msra.mxu0 0.0
  %491 = vmatprep.subr.mxu0 0.0
  %492 = vmatpush1.msra.mxu0 0.0
  %493 = vmatprep.subr.mxu0 0.0
  %494 = vmatpush1.msra.mxu0 0.0
  %495 = vmatprep.subr.mxu0 0.0
  %496 = vmatpush1.msra.mxu0 0.0
  %497 = vmatprep.subr.mxu0 0.0
  %498 = vmatpush1.msra.mxu0 0.0
  %499 = vmatprep.subr.mxu0 0.0
  %500 = vmatpush1.msra.mxu0 0.0
  %501 = vmatprep.subr.mxu0 0.0
  %502 = vmatpush1.msra.mxu0 0.0
  %503 = vmatprep.subr.mxu0 0.0
  %504 = vmatpush1.msra.mxu0 0.0
  %505 = vmatprep.subr.mxu0 0.0
  %506 = vmatpush1.msra.mxu0 0.0
  %507 = vmatprep.subr.mxu0 0.0
  %508 = vmatpush1.msra.mxu0 %v461
  %509 = vmatprep.subr.mxu0 0.0
  %510 = vmatpush1.msra.mxu0 %v460
  %511 = vmatprep.subr.mxu0 0.0
  %512 = vmatpush1.msra.mxu0 %v459
  %513 = vmatprep.subr.mxu0 0.0
  %514 = vmatpush1.msra.mxu0 %v458
  %515 = vmatprep.subr.mxu0 0.0
  %516 = vmatpush1.msra.mxu0 %v457
  %517 = vmatprep.subr.mxu0 0.0
  %518 = vmatpush1.msra.mxu0 %v456
  %519 = vmatprep.subr.mxu0 0.0
  %520 = vmatpush2.msra.mxu0 0.0
  %521 = vmatprep.subr.mxu0 0.0
  %522 = vmatpush2.msra.mxu0 0.0
  %523 = vmatprep.subr.mxu0 0.0
  %524 = vmatpush2.msra.mxu0 0.0
  %525 = vmatprep.subr.mxu0 0.0
  %526 = vmatpush2.msra.mxu0 0.0
  %527 = vmatprep.subr.mxu0 0.0
  %528 = vmatpush2.msra.mxu0 0.0
  %529 = vmatprep.subr.mxu0 0.0
  %530 = vmatpush2.msra.mxu0 0.0
  %531 = vmatprep.subr.mxu0 0.0
  %532 = vmatpush2.msra.mxu0 0.0
  %533 = vmatprep.subr.mxu0 0.0
  %534 = vmatpush2.msra.mxu0 0.0
  %535 = vmatprep.subr.mxu0 0.0
  %536 = vmatpush2.msra.mxu0 0.0
  %537 = vmatprep.subr.mxu0 0.0
  %538 = vmatpush2.msra.mxu0 0.0
  %539 = vmatprep.subr.mxu0 0.0
  %540 = vmatpush2.msra.mxu0 0.0
  %541 = vmatprep.subr.mxu0 0.0
  %542 = vmatpush2.msra.mxu0 0.0
  %543 = vmatprep.subr.mxu0 0.0
  %544 = vmatpush2.msra.mxu0 0.0
  %545 = vmatprep.subr.mxu0 0.0
  %546 = vmatpush2.msra.mxu0 0.0
  %547 = vmatprep.subr.mxu0 0.0
  %548 = vmatpush2.msra.mxu0 0.0
  %549 = vmatprep.subr.mxu0 0.0
  %550 = vmatpush2.msra.mxu0 0.0
  %551 = vmatprep.mubr.f32.mxu0 0.0
  %552 = vmatmul.mubr.f32.gmra.mxu0 %v470
  %v553 = vpop.f32.mrf.mxu0
  %v554 = vadd.f32 0.0, %v553
  %v555 = vpop.f32.mrf.mxu0
  %556 = vmatprep.mubr.f32.mxu0 0.0
  %557 = vmatmul.mubr.f32.gmra.mxu0 %v473
  %v558 = vpop.f32.mrf.mxu0
  %v559 = vadd.f32 0.0, %v558
  %v560 = vpop.f32.mrf.mxu0
  %561 = vmatprep.mubr.f32.mxu0 0.0
  %562 = vmatmul.mubr.f32.gmra.mxu0 %v476
  %v563 = vpop.f32.mrf.mxu0
  %v564 = vadd.f32 0.0, %v563
  %v565 = vpop.f32.mrf.mxu0
  %566 = vmatprep.mubr.f32.mxu0 0.0
  %567 = vmatmul.mubr.f32.gmra.mxu0 %v479
  %v568 = vpop.f32.mrf.mxu0
  %v569 = vadd.f32 0.0, %v568
  %v570 = vpop.f32.mrf.mxu0
  %571 = vmatprep.mubr.f32.mxu0 0.0
  %572 = vmatmul.mubr.f32.gmra.mxu0 %v482
  %v573 = vpop.f32.mrf.mxu0
  %v574 = vadd.f32 0.0, %v573
  %v575 = vpop.f32.mrf.mxu0
  %576 = vmatprep.mubr.f32.mxu0 0.0
  %577 = vmatmul.mubr.f32.gmra.mxu0 %v485
  %v578 = vpop.f32.mrf.mxu0
  %v579 = vadd.f32 0.0, %v578
  %v580 = vpop.f32.mrf.mxu0
  %581 = vdwg.mxu0
  %v582 = vld [vmem:[%s9] sm:$0xff]
  %v583 = vld [vmem:[%s9 + $0x8] sm:$0xff]
  %v584 = vld [vmem:[%s9 + $0x10] sm:$0xff]
  %v585 = vld [vmem:[%s9 + $0x18] sm:$0xff]
  %v586 = vld [vmem:[%s9 + $0x20] sm:$0xff]
  %v587 = vld [vmem:[%s9 + $0x28] sm:$0xff]
  %v588 = vld [vmem:[%s9 + $0x30] sm:$0xff]
  %v589 = vld [vmem:[%s9 + $0x38] sm:$0xff]
  %v590 = vld [vmem:[%s9 + $0x40] sm:$0xff]
  %v591 = vld [vmem:[%s9 + $0x48] sm:$0xff]
  %v592 = vld [vmem:[%s9 + $0x50] sm:$0xff]
  %v593 = vld [vmem:[%s9 + $0x58] sm:$0xff]
  %v594 = vld [vmem:[%s9 + $0x60] sm:$0xff]
  %v595 = vld [vmem:[%s9 + $0x68] sm:$0xff]
  %v596 = vld [vmem:[%s9 + $0x70] sm:$0xff]
  %v597 = vld [vmem:[%s9 + $0x78] sm:$0xff]
  %v598 = vld [vmem:[%s10] sm:$0x1]
  %v600 = vlaneseq
  %v601 = vshrl.u32 %v600, 7
  %v602 = vsub.s32 0, %v601
  %v603 = vrot.slane %v598, %v602
  %605 = vmatprep.subr.mxu0 0.0
  %606 = vmatpush1.msra.mxu0 %v597
  %607 = vmatprep.subr.mxu0 0.0
  %608 = vmatpush1.msra.mxu0 %v596
  %609 = vmatprep.subr.mxu0 0.0
  %610 = vmatpush1.msra.mxu0 %v595
  %611 = vmatprep.subr.mxu0 0.0
  %612 = vmatpush1.msra.mxu0 %v594
  %613 = vmatprep.subr.mxu0 0.0
  %614 = vmatpush1.msra.mxu0 %v593
  %615 = vmatprep.subr.mxu0 0.0
  %616 = vmatpush1.msra.mxu0 %v592
  %617 = vmatprep.subr.mxu0 0.0
  %618 = vmatpush1.msra.mxu0 %v591
  %619 = vmatprep.subr.mxu0 0.0
  %620 = vmatpush1.msra.mxu0 %v590
  %621 = vmatprep.subr.mxu0 0.0
  %622 = vmatpush1.msra.mxu0 %v589
  %623 = vmatprep.subr.mxu0 0.0
  %624 = vmatpush1.msra.mxu0 %v588
  %625 = vmatprep.subr.mxu0 0.0
  %626 = vmatpush1.msra.mxu0 %v587
  %627 = vmatprep.subr.mxu0 0.0
  %628 = vmatpush1.msra.mxu0 %v586
  %629 = vmatprep.subr.mxu0 0.0
  %630 = vmatpush1.msra.mxu0 %v585
  %631 = vmatprep.subr.mxu0 0.0
  %632 = vmatpush1.msra.mxu0 %v584
  %633 = vmatprep.subr.mxu0 0.0
  %634 = vmatpush1.msra.mxu0 %v583
  %635 = vmatprep.subr.mxu0 0.0
  %636 = vmatpush1.msra.mxu0 %v582
  %637 = vmatprep.subr.mxu0 0.0
  %638 = vmatpush2.msra.mxu0 0.0
  %639 = vmatprep.subr.mxu0 0.0
  %640 = vmatpush2.msra.mxu0 0.0
  %641 = vmatprep.subr.mxu0 0.0
  %642 = vmatpush2.msra.mxu0 0.0
  %643 = vmatprep.subr.mxu0 0.0
  %644 = vmatpush2.msra.mxu0 0.0
  %645 = vmatprep.subr.mxu0 0.0
  %646 = vmatpush2.msra.mxu0 0.0
  %647 = vmatprep.subr.mxu0 0.0
  %648 = vmatpush2.msra.mxu0 0.0
  %649 = vmatprep.subr.mxu0 0.0
  %650 = vmatpush2.msra.mxu0 0.0
  %651 = vmatprep.subr.mxu0 0.0
  %652 = vmatpush2.msra.mxu0 0.0
  %653 = vmatprep.subr.mxu0 0.0
  %654 = vmatpush2.msra.mxu0 0.0
  %655 = vmatprep.subr.mxu0 0.0
  %656 = vmatpush2.msra.mxu0 0.0
  %657 = vmatprep.subr.mxu0 0.0
  %658 = vmatpush2.msra.mxu0 0.0
  %659 = vmatprep.subr.mxu0 0.0
  %660 = vmatpush2.msra.mxu0 0.0
  %661 = vmatprep.subr.mxu0 0.0
  %662 = vmatpush2.msra.mxu0 0.0
  %663 = vmatprep.subr.mxu0 0.0
  %664 = vmatpush2.msra.mxu0 0.0
  %665 = vmatprep.subr.mxu0 0.0
  %666 = vmatpush2.msra.mxu0 0.0
  %667 = vmatprep.subr.mxu0 0.0
  %668 = vmatpush2.msra.mxu0 0.0
  %669 = vmatprep.mubr.f32.mxu0 0.0
  %670 = vmatmul.mubr.f32.gmra.mxu0 %v554
  %v671 = vpop.f32.mrf.mxu0
  %v672 = vadd.f32 %v603, %v671
  %v673 = vpop.f32.mrf.mxu0
  %674 = vmatprep.mubr.f32.mxu0 0.0
  %675 = vmatmul.mubr.f32.gmra.mxu0 %v559
  %v676 = vpop.f32.mrf.mxu0
  %v677 = vadd.f32 %v603, %v676
  %v678 = vpop.f32.mrf.mxu0
  %679 = vmatprep.mubr.f32.mxu0 0.0
  %680 = vmatmul.mubr.f32.gmra.mxu0 %v564
  %v681 = vpop.f32.mrf.mxu0
  %v682 = vadd.f32 %v603, %v681
  %v683 = vpop.f32.mrf.mxu0
  %684 = vmatprep.mubr.f32.mxu0 0.0
  %685 = vmatmul.mubr.f32.gmra.mxu0 %v569
  %v686 = vpop.f32.mrf.mxu0
  %v687 = vadd.f32 %v603, %v686
  %v688 = vpop.f32.mrf.mxu0
  %689 = vmatprep.mubr.f32.mxu0 0.0
  %690 = vmatmul.mubr.f32.gmra.mxu0 %v574
  %v691 = vpop.f32.mrf.mxu0
  %v692 = vadd.f32 %v603, %v691
  %v693 = vpop.f32.mrf.mxu0
  %694 = vmatprep.mubr.f32.mxu0 0.0
  %695 = vmatmul.mubr.f32.gmra.mxu0 %v579
  %v696 = vpop.f32.mrf.mxu0
  %v697 = vadd.f32 %v603, %v696
  %v698 = vpop.f32.mrf.mxu0
  %699 = vdwg.mxu0
  %v700 = vld [vmem:[%s11] sm:$0xff]
  %v701 = vld [vmem:[%s11 + $0x8] sm:$0xf]
  %v702 = vld [vmem:[%s11 + $0xc] sm:$0xff]
  %v703 = vld [vmem:[%s11 + $0x14] sm:$0xf]
  %v704 = vld [vmem:[%s11 + $0x18] sm:$0xff]
  %v705 = vld [vmem:[%s11 + $0x20] sm:$0xf]
  %v706 = vld [vmem:[%s11 + $0x24] sm:$0xff]
  %v707 = vld [vmem:[%s11 + $0x2c] sm:$0xf]
  %v708 = vld [vmem:[%s11 + $0x30] sm:$0xff]
  %v709 = vld [vmem:[%s11 + $0x38] sm:$0xf]
  %v710 = vld [vmem:[%s11 + $0x3c] sm:$0xff]
  %v711 = vld [vmem:[%s11 + $0x44] sm:$0xf]
  %v712 = vld [vmem:[%s11 + $0x48] sm:$0xff]
  %v713 = vld [vmem:[%s11 + $0x50] sm:$0xf]
  %v714 = vld [vmem:[%s11 + $0x54] sm:$0xff]
  %v715 = vld [vmem:[%s11 + $0x5c] sm:$0xf]
  %v716 = vld [vmem:[%s11 + $0x60] sm:$0xff]
  %v717 = vld [vmem:[%s11 + $0x68] sm:$0xf]
  %v718 = vld [vmem:[%s11 + $0x6c] sm:$0xff]
  %v719 = vld [vmem:[%s11 + $0x74] sm:$0xf]
  %v720 = vld [vmem:[%s11 + $0x78] sm:$0xff]
  %v721 = vld [vmem:[%s11 + $0x80] sm:$0xf]
  %v722 = vld [vmem:[%s11 + $0x84] sm:$0xff]
  %v723 = vld [vmem:[%s11 + $0x8c] sm:$0xf]
  %v724 = vld [vmem:[%s13] sm:$0x1]
  %v725 = vpack.c.bf16 0.0, 0.0
  %v738 = vunpack.c.l.b16 %v700
  %v739 = vunpack.c.h.b16 %v700
  %v740 = vunpack.c.l.b16 %v702
  %v741 = vunpack.c.h.b16 %v702
  %v742 = vunpack.c.l.b16 %v704
  %v743 = vunpack.c.h.b16 %v704
  %v744 = vunpack.c.l.b16 %v706
  %v745 = vunpack.c.h.b16 %v706
  %v746 = vunpack.c.l.b16 %v708
  %v747 = vunpack.c.h.b16 %v708
  %v748 = vunpack.c.l.b16 %v710
  %v749 = vunpack.c.h.b16 %v710
  %v750 = vunpack.c.l.b16 %v712
  %v751 = vunpack.c.h.b16 %v712
  %v752 = vunpack.c.l.b16 %v714
  %v753 = vunpack.c.h.b16 %v714
  %v754 = vunpack.c.l.b16 %v716
  %v755 = vunpack.c.h.b16 %v716
  %v756 = vunpack.c.l.b16 %v718
  %v757 = vunpack.c.h.b16 %v718
  %v758 = vunpack.c.l.b16 %v720
  %v759 = vunpack.c.h.b16 %v720
  %v760 = vunpack.c.l.b16 %v722
  %v761 = vunpack.c.h.b16 %v722
  %v762 = vpack.c.b16 %v740, %v738
  %v763 = vpack.c.b16 %v741, %v739
  %v764 = vpack.c.b16 %v744, %v742
  %v765 = vpack.c.b16 %v745, %v743
  %v766 = vpack.c.b16 %v748, %v746
  %v767 = vpack.c.b16 %v749, %v747
  %v768 = vpack.c.b16 %v752, %v750
  %v769 = vpack.c.b16 %v753, %v751
  %v770 = vpack.c.b16 %v756, %v754
  %v771 = vpack.c.b16 %v757, %v755
  %v772 = vpack.c.b16 %v760, %v758
  %v773 = vpack.c.b16 %v761, %v759
  %vm786 = vcmask 785408
  %v788 = vsel %vm786, %v725, 0
  %790 = vmatprep.subr.bf16.mxu0 0
  %791 = vmatpush1.bf16.msra.mxu0 0
  %792 = vmatprep.subr.bf16.mxu0 0
  %793 = vmatpush1.bf16.msra.mxu0 0
  %794 = vmatprep.subr.bf16.mxu0 %v773
  %795 = vmatpush1.bf16.msra.mxu0 %v772
  %796 = vmatprep.subr.bf16.mxu0 %v771
  %797 = vmatpush1.bf16.msra.mxu0 %v770
  %798 = vmatprep.subr.bf16.mxu0 %v769
  %799 = vmatpush1.bf16.msra.mxu0 %v768
  %800 = vmatprep.subr.bf16.mxu0 %v767
  %801 = vmatpush1.bf16.msra.mxu0 %v766
  %802 = vmatprep.subr.bf16.mxu0 %v765
  %803 = vmatpush1.bf16.msra.mxu0 %v764
  %804 = vmatprep.subr.bf16.mxu0 %v763
  %805 = vmatpush1.bf16.msra.mxu0 %v762
  %806 = vmatprep.subr.bf16.mxu0 0
  %807 = vmatpush2.bf16.msra.mxu0 0
  %808 = vmatprep.subr.bf16.mxu0 0
  %809 = vmatpush2.bf16.msra.mxu0 0
  %810 = vmatprep.subr.bf16.mxu0 0
  %811 = vmatpush2.bf16.msra.mxu0 0
  %812 = vmatprep.subr.bf16.mxu0 0
  %813 = vmatpush2.bf16.msra.mxu0 0
  %814 = vmatprep.subr.bf16.mxu0 0
  %815 = vmatpush2.bf16.msra.mxu0 0
  %816 = vmatprep.subr.bf16.mxu0 0
  %817 = vmatpush2.bf16.msra.mxu0 0
  %818 = vmatprep.subr.bf16.mxu0 0
  %819 = vmatpush2.bf16.msra.mxu0 0
  %820 = vmatprep.subr.bf16.mxu0 0
  %821 = vmatpush2.bf16.msra.mxu0 0
  %822 = vmatprep.mubr.bf16.mxu0 0
  %823 = vmatmul.mubr.bf16.gmra.mxu0 %v788
  %v824 = vpop.f32.mrf.mxu0
  %v825 = vadd.f32 0.0, %v824
  %v826 = vpop.f32.mrf.mxu0
  %v827 = vadd.f32 0.0, %v826
  %v828 = vpop.f32.mrf.mxu0
  %v829 = vpop.f32.mrf.mxu0
  %830 = vdwg.mxu0
  %v831 = vld [vmem:[%s14] sm:$0xff]
  %vm832 = vcmp.gt.f32.partialorder %v831, 0.5
  %v833 = vadd.f32 %v825, %v157
  %v834 = vxor.u32 %v833, 2147483648
  %v835 = vmul.f32 %v834, 1.442695
  %v836 = vpow.pop %v835
  %v837 = vadd.f32 %v836, 1.0
  %v838 = vrcp.pop %v837
  %v839 = vmul.f32 1.0, %v838
  %v840 = vtanh.pop %v833
  %v841 = vmul.f32 %v839, 0.0
  %843 = vrot.lane.b32.xlu0 %v840, 64
  %v844 = vpop.permute.xlu0 %843
  %v846 = vmul.f32 %v839, %v844
  %848 = vrot.lane.b32.xlu0 %v846, 32
  %v849 = vpop.permute.xlu0 %848
  %v851 = vadd.f32 %v841, %v849
  %v852 = vtanh.pop %v851
  %854 = vrot.lane.b32.xlu0 %v852, 64
  %v855 = vpop.permute.xlu0 %854
  %v857 = vmul.f32 %v839, %v855
  %v858 = vadd.f32 %v827, %v672
  %v859 = vxor.u32 %v858, 2147483648
  %v860 = vmul.f32 %v859, 1.442695
  %v861 = vpow.pop %v860
  %v862 = vadd.f32 %v861, 1.0
  %v863 = vrcp.pop %v862
  %v864 = vmul.f32 1.0, %v863
  %v865 = vtanh.pop %v858
  %v866 = vmul.f32 %v864, 0.0
  %868 = vrot.lane.b32.xlu0 %v865, 64
  %v869 = vpop.permute.xlu0 %868
  %v871 = vmul.f32 %v864, %v869
  %873 = vrot.lane.b32.xlu0 %v871, 32
  %v874 = vpop.permute.xlu0 %873
  %v876 = vadd.f32 %v866, %v874
  %v877 = vtanh.pop %v876
  %879 = vrot.lane.b32.xlu0 %v877, 64
  %v880 = vpop.permute.xlu0 %879
  %v882 = vmul.f32 %v864, %v880
  %884 = vrot.lane.b32.xlu0 %v857, 32
  %v885 = vpop.permute.xlu0 %884
  %v887 = vsel %vm832, %v885, 0.0
  %889 = vrot.lane.b32.xlu0 %v851, 96
  %v890 = vpop.permute.xlu0 %889
  %v892 = vsel %vm832, %v890, 0.0
  %894 = vrot.lane.b32.xlu0 %v882, 32
  %v895 = vpop.permute.xlu0 %894
  %v897 = vsel %vm832, %v895, 0.0
  %899 = vrot.lane.b32.xlu0 %v876, 96
  %v900 = vpop.permute.xlu0 %899
  %v902 = vsel %vm832, %v900, 0.0
  %904 = vrot.lane.b32.xlu0 %v897, 32
  %v905 = vpop.permute.xlu0 %904
  %v907 = vsel %vm71, %v887, %v905
  %vm908 = vcmask 523264
  %v909 = vsel %vm908, %v907, 0.0
  %v910 = vpack.c.bf16 %v909, %v909
  %v923 = vunpack.c.l.b16 %v701
  %v924 = vunpack.c.l.b16 %v703
  %v925 = vunpack.c.l.b16 %v705
  %v926 = vunpack.c.l.b16 %v707
  %v927 = vunpack.c.l.b16 %v709
  %v928 = vunpack.c.l.b16 %v711
  %v929 = vunpack.c.l.b16 %v713
  %v930 = vunpack.c.l.b16 %v715
  %v931 = vunpack.c.l.b16 %v717
  %v932 = vunpack.c.l.b16 %v719
  %v933 = vunpack.c.l.b16 %v721
  %v934 = vunpack.c.l.b16 %v723
  %v935 = vpack.c.b16 %v924, %v923
  %v936 = vpack.c.b16 %v926, %v925
  %v937 = vpack.c.b16 %v928, %v927
  %v938 = vpack.c.b16 %v930, %v929
  %v939 = vpack.c.b16 %v932, %v931
  %v940 = vpack.c.b16 %v934, %v933
  %v948 = vsel %vm786, %v910, 0
  %950 = vmatprep.subr.bf16.mxu0 0
  %951 = vmatpush1.bf16.msra.mxu0 0
  %952 = vmatprep.subr.bf16.mxu0 0
  %953 = vmatpush1.bf16.msra.mxu0 0
  %954 = vmatprep.subr.bf16.mxu0 %v773
  %955 = vmatpush1.bf16.msra.mxu0 %v772
  %956 = vmatprep.subr.bf16.mxu0 %v771
  %957 = vmatpush1.bf16.msra.mxu0 %v770
  %958 = vmatprep.subr.bf16.mxu0 %v769
  %959 = vmatpush1.bf16.msra.mxu0 %v768
  %960 = vmatprep.subr.bf16.mxu0 %v767
  %961 = vmatpush1.bf16.msra.mxu0 %v766
  %962 = vmatprep.subr.bf16.mxu0 %v765
  %963 = vmatpush1.bf16.msra.mxu0 %v764
  %964 = vmatprep.subr.bf16.mxu0 %v763
  %965 = vmatpush1.bf16.msra.mxu0 %v762
  %966 = vmatprep.subr.bf16.mxu0 0
  %967 = vmatpush2.bf16.msra.mxu0 0
  %968 = vmatprep.subr.bf16.mxu0 0
  %969 = vmatpush2.bf16.msra.mxu0 0
  %970 = vmatprep.subr.bf16.mxu0 0
  %971 = vmatpush2.bf16.msra.mxu0 0
  %972 = vmatprep.subr.bf16.mxu0 0
  %973 = vmatpush2.bf16.msra.mxu0 0
  %974 = vmatprep.subr.bf16.mxu0 0
  %975 = vmatpush2.bf16.msra.mxu0 0
  %976 = vmatprep.subr.bf16.mxu0 0
  %977 = vmatpush2.bf16.msra.mxu0 0
  %978 = vmatprep.subr.bf16.mxu0 0
  %979 = vmatpush2.bf16.msra.mxu0 0
  %980 = vmatprep.subr.bf16.mxu0 0
  %981 = vmatpush2.bf16.msra.mxu0 0
  %982 = vmatprep.mubr.bf16.mxu0 0
  %983 = vmatmul.mubr.bf16.gmra.mxu0 %v948
  %v984 = vpop.f32.mrf.mxu0
  %v985 = vadd.f32 0.0, %v984
  %v986 = vpop.f32.mrf.mxu0
  %v987 = vadd.f32 0.0, %v986
  %v988 = vpop.f32.mrf.mxu0
  %v989 = vpop.f32.mrf.mxu0
  %990 = vdwg.mxu0
  %991 = vmatprep.subr.bf16.mxu0 0
  %992 = vmatpush1.bf16.msra.mxu0 0
  %993 = vmatprep.subr.bf16.mxu0 0
  %994 = vmatpush1.bf16.msra.mxu0 0
  %995 = vmatprep.subr.bf16.mxu0 0
  %996 = vmatpush1.bf16.msra.mxu0 %v940
  %997 = vmatprep.subr.bf16.mxu0 0
  %998 = vmatpush1.bf16.msra.mxu0 %v939
  %999 = vmatprep.subr.bf16.mxu0 0
  %1000 = vmatpush1.bf16.msra.mxu0 %v938
  %1001 = vmatprep.subr.bf16.mxu0 0
  %1002 = vmatpush1.bf16.msra.mxu0 %v937
  %1003 = vmatprep.subr.bf16.mxu0 0
  %1004 = vmatpush1.bf16.msra.mxu0 %v936
  %1005 = vmatprep.subr.bf16.mxu0 0
  %1006 = vmatpush1.bf16.msra.mxu0 %v935
  %1007 = vmatprep.subr.bf16.mxu0 0
  %1008 = vmatpush2.bf16.msra.mxu0 0
  %1009 = vmatprep.subr.bf16.mxu0 0
  %1010 = vmatpush2.bf16.msra.mxu0 0
  %1011 = vmatprep.subr.bf16.mxu0 0
  %1012 = vmatpush2.bf16.msra.mxu0 0
  %1013 = vmatprep.subr.bf16.mxu0 0
  %1014 = vmatpush2.bf16.msra.mxu0 0
  %1015 = vmatprep.subr.bf16.mxu0 0
  %1016 = vmatpush2.bf16.msra.mxu0 0
  %1017 = vmatprep.subr.bf16.mxu0 0
  %1018 = vmatpush2.bf16.msra.mxu0 0
  %1019 = vmatprep.subr.bf16.mxu0 0
  %1020 = vmatpush2.bf16.msra.mxu0 0
  %1021 = vmatprep.subr.bf16.mxu0 0
  %1022 = vmatpush2.bf16.msra.mxu0 0
  %1023 = vmatprep.mubr.bf16.mxu0 0
  %1024 = vmatmul.mubr.bf16.gmra.mxu0 %v948
  %v1025 = vpop.f32.mrf.mxu0
  %v1026 = vadd.f32 0.0, %v1025
  %v1027 = vpop.f32.mrf.mxu0
  %v1028 = vpop.f32.mrf.mxu0
  %v1029 = vpop.f32.mrf.mxu0
  %1030 = vdwg.mxu0
  %s1031 = scalar_lea.vmem %s14, 8
  %v1032 = vld [vmem:[%s1031] sm:$0xff]
  %vm1033 = vcmp.gt.f32.partialorder %v1032, 0.5
  %v1034 = vadd.f32 %v985, %v162
  %v1035 = vxor.u32 %v1034, 2147483648
  %v1036 = vmul.f32 %v1035, 1.442695
  %v1037 = vpow.pop %v1036
  %v1038 = vadd.f32 %v1037, 1.0
  %v1039 = vrcp.pop %v1038
  %v1040 = vmul.f32 1.0, %v1039
  %v1041 = vtanh.pop %v1034
  %1043 = vrot.lane.b32.xlu0 %v892, 32
  %v1044 = vpop.permute.xlu0 %1043
  %v1046 = vmul.f32 %v1040, %v1044
  %1048 = vrot.lane.b32.xlu0 %v1041, 64
  %v1049 = vpop.permute.xlu0 %1048
  %v1051 = vmul.f32 %v1040, %v1049
  %1053 = vrot.lane.b32.xlu0 %v1051, 32
  %v1054 = vpop.permute.xlu0 %1053
  %v1056 = vadd.f32 %v1046, %v1054
  %v1057 = vtanh.pop %v1056
  %1059 = vrot.lane.b32.xlu0 %v1057, 64
  %v1060 = vpop.permute.xlu0 %1059
  %v1062 = vmul.f32 %v1040, %v1060
  %v1063 = vadd.f32 %v987, %v677
  %v1064 = vxor.u32 %v1063, 2147483648
  %v1065 = vmul.f32 %v1064, 1.442695
  %v1066 = vpow.pop %v1065
  %v1067 = vadd.f32 %v1066, 1.0
  %v1068 = vrcp.pop %v1067
  %v1069 = vmul.f32 1.0, %v1068
  %v1070 = vtanh.pop %v1063
  %1072 = vrot.lane.b32.xlu0 %v902, 32
  %v1073 = vpop.permute.xlu0 %1072
  %v1075 = vmul.f32 %v1069, %v1073
  %1077 = vrot.lane.b32.xlu0 %v1070, 64
  %v1078 = vpop.permute.xlu0 %1077
  %v1080 = vmul.f32 %v1069, %v1078
  %1082 = vrot.lane.b32.xlu0 %v1080, 32
  %v1083 = vpop.permute.xlu0 %1082
  %v1085 = vadd.f32 %v1075, %v1083
  %v1086 = vtanh.pop %v1085
  %1088 = vrot.lane.b32.xlu0 %v1086, 64
  %v1089 = vpop.permute.xlu0 %1088
  %v1091 = vmul.f32 %v1069, %v1089
  %v1093 = vlaneseq
  %v1094 = vshrl.u32 %v1093, 7
  %v1095 = vsub.s32 0, %v1094
  %v1096 = vrot.slane %v724, %v1095
  %v1098 = vadd.f32 %v1026, %v1096
  %v1099 = vxor.u32 %v1098, 2147483648
  %v1100 = vmul.f32 %v1099, 1.442695
  %v1101 = vpow.pop %v1100
  %v1102 = vadd.f32 %v1101, 1.0
  %v1103 = vrcp.pop %v1102
  %v1104 = vmul.f32 1.0, %v1103
  %v1105 = vtanh.pop %v1098
  %v1106 = vmul.f32 %v1104, 0.0
  %1108 = vrot.lane.b32.xlu0 %v1105, 64
  %v1109 = vpop.permute.xlu0 %1108
  %v1111 = vmul.f32 %v1104, %v1109
  %1113 = vrot.lane.b32.xlu0 %v1111, 32
  %v1114 = vpop.permute.xlu0 %1113
  %v1116 = vadd.f32 %v1106, %v1114
  %v1117 = vtanh.pop %v1116
  %1119 = vrot.lane.b32.xlu0 %v1117, 64
  %v1120 = vpop.permute.xlu0 %1119
  %v1122 = vmul.f32 %v1104, %v1120
  %1124 = vrot.lane.b32.xlu0 %v1122, 32
  %v1125 = vpop.permute.xlu0 %1124
  %v1127 = vsel %vm832, %v1125, 0.0
  %1129 = vrot.lane.b32.xlu0 %v1116, 96
  %v1130 = vpop.permute.xlu0 %1129
  %v1132 = vsel %vm832, %v1130, 0.0
  %1134 = vrot.lane.b32.xlu0 %v1062, 32
  %v1135 = vpop.permute.xlu0 %1134
  %v1137 = vsel %vm1033, %v1135, %v887
  %1139 = vrot.lane.b32.xlu0 %v1056, 96
  %v1140 = vpop.permute.xlu0 %1139
  %v1142 = vsel %vm1033, %v1140, %v892
  %1144 = vrot.lane.b32.xlu0 %v1091, 32
  %v1145 = vpop.permute.xlu0 %1144
  %v1147 = vsel %vm1033, %v1145, %v897
  %1149 = vrot.lane.b32.xlu0 %v1085, 96
  %v1150 = vpop.permute.xlu0 %1149
  %v1152 = vsel %vm1033, %v1150, %v902
  %1154 = vrot.lane.b32.xlu0 %v1147, 32
  %v1155 = vpop.permute.xlu0 %1154
  %1158 = vrot.lane.b32.xlu0 %v1127, 64
  %v1159 = vpop.permute.xlu0 %1158
  %v1161 = vsel %vm71, %v1137, %v1155
  %v1162 = vsel %vm908, %v1161, %v1159
  %v1163 = vpack.c.bf16 %v1162, %v1162
  %v1165 = vsel %vm786, %v1163, 0
  %1167 = vmatprep.subr.bf16.mxu0 0
  %1168 = vmatpush1.bf16.msra.mxu0 0
  %1169 = vmatprep.subr.bf16.mxu0 0
  %1170 = vmatpush1.bf16.msra.mxu0 0
  %1171 = vmatprep.subr.bf16.mxu0 %v773
  %1172 = vmatpush1.bf16.msra.mxu0 %v772
  %1173 = vmatprep.subr.bf16.mxu0 %v771
  %1174 = vmatpush1.bf16.msra.mxu0 %v770
  %1175 = vmatprep.subr.bf16.mxu0 %v769
  %1176 = vmatpush1.bf16.msra.mxu0 %v768
  %1177 = vmatprep.subr.bf16.mxu0 %v767
  %1178 = vmatpush1.bf16.msra.mxu0 %v766
  %1179 = vmatprep.subr.bf16.mxu0 %v765
  %1180 = vmatpush1.bf16.msra.mxu0 %v764
  %1181 = vmatprep.subr.bf16.mxu0 %v763
  %1182 = vmatpush1.bf16.msra.mxu0 %v762
  %1183 = vmatprep.subr.bf16.mxu0 0
  %1184 = vmatpush2.bf16.msra.mxu0 0
  %1185 = vmatprep.subr.bf16.mxu0 0
  %1186 = vmatpush2.bf16.msra.mxu0 0
  %1187 = vmatprep.subr.bf16.mxu0 0
  %1188 = vmatpush2.bf16.msra.mxu0 0
  %1189 = vmatprep.subr.bf16.mxu0 0
  %1190 = vmatpush2.bf16.msra.mxu0 0
  %1191 = vmatprep.subr.bf16.mxu0 0
  %1192 = vmatpush2.bf16.msra.mxu0 0
  %1193 = vmatprep.subr.bf16.mxu0 0
  %1194 = vmatpush2.bf16.msra.mxu0 0
  %1195 = vmatprep.subr.bf16.mxu0 0
  %1196 = vmatpush2.bf16.msra.mxu0 0
  %1197 = vmatprep.subr.bf16.mxu0 0
  %1198 = vmatpush2.bf16.msra.mxu0 0
  %1199 = vmatprep.mubr.bf16.mxu0 0
  %1200 = vmatmul.mubr.bf16.gmra.mxu0 %v1165
  %v1201 = vpop.f32.mrf.mxu0
  %v1202 = vadd.f32 0.0, %v1201
  %v1203 = vpop.f32.mrf.mxu0
  %v1204 = vadd.f32 0.0, %v1203
  %v1205 = vpop.f32.mrf.mxu0
  %v1206 = vpop.f32.mrf.mxu0
  %1207 = vdwg.mxu0
  %1208 = vmatprep.subr.bf16.mxu0 0
  %1209 = vmatpush1.bf16.msra.mxu0 0
  %1210 = vmatprep.subr.bf16.mxu0 0
  %1211 = vmatpush1.bf16.msra.mxu0 0
  %1212 = vmatprep.subr.bf16.mxu0 0
  %1213 = vmatpush1.bf16.msra.mxu0 %v940
  %1214 = vmatprep.subr.bf16.mxu0 0
  %1215 = vmatpush1.bf16.msra.mxu0 %v939
  %1216 = vmatprep.subr.bf16.mxu0 0
  %1217 = vmatpush1.bf16.msra.mxu0 %v938
  %1218 = vmatprep.subr.bf16.mxu0 0
  %1219 = vmatpush1.bf16.msra.mxu0 %v937
  %1220 = vmatprep.subr.bf16.mxu0 0
  %1221 = vmatpush1.bf16.msra.mxu0 %v936
  %1222 = vmatprep.subr.bf16.mxu0 0
  %1223 = vmatpush1.bf16.msra.mxu0 %v935
  %1224 = vmatprep.subr.bf16.mxu0 0
  %1225 = vmatpush2.bf16.msra.mxu0 0
  %1226 = vmatprep.subr.bf16.mxu0 0
  %1227 = vmatpush2.bf16.msra.mxu0 0
  %1228 = vmatprep.subr.bf16.mxu0 0
  %1229 = vmatpush2.bf16.msra.mxu0 0
  %1230 = vmatprep.subr.bf16.mxu0 0
  %1231 = vmatpush2.bf16.msra.mxu0 0
  %1232 = vmatprep.subr.bf16.mxu0 0
  %1233 = vmatpush2.bf16.msra.mxu0 0
  %1234 = vmatprep.subr.bf16.mxu0 0
  %1235 = vmatpush2.bf16.msra.mxu0 0
  %1236 = vmatprep.subr.bf16.mxu0 0
  %1237 = vmatpush2.bf16.msra.mxu0 0
  %1238 = vmatprep.subr.bf16.mxu0 0
  %1239 = vmatpush2.bf16.msra.mxu0 0
  %1240 = vmatprep.mubr.bf16.mxu0 0
  %1241 = vmatmul.mubr.bf16.gmra.mxu0 %v1165
  %v1242 = vpop.f32.mrf.mxu0
  %v1243 = vadd.f32 0.0, %v1242
  %v1244 = vpop.f32.mrf.mxu0
  %v1245 = vpop.f32.mrf.mxu0
  %v1246 = vpop.f32.mrf.mxu0
  %1247 = vdwg.mxu0
  %s1248 = scalar_lea.vmem %s14, 16
  %v1249 = vld [vmem:[%s1248] sm:$0xff]
  %vm1250 = vcmp.gt.f32.partialorder %v1249, 0.5
  %v1251 = vadd.f32 %v1202, %v167
  %v1252 = vxor.u32 %v1251, 2147483648
  %v1253 = vmul.f32 %v1252, 1.442695
  %v1254 = vpow.pop %v1253
  %v1255 = vadd.f32 %v1254, 1.0
  %v1256 = vrcp.pop %v1255
  %v1257 = vmul.f32 1.0, %v1256
  %v1258 = vtanh.pop %v1251
  %1260 = vrot.lane.b32.xlu0 %v1142, 32
  %v1261 = vpop.permute.xlu0 %1260
  %v1263 = vmul.f32 %v1257, %v1261
  %1265 = vrot.lane.b32.xlu0 %v1258, 64
  %v1266 = vpop.permute.xlu0 %1265
  %v1268 = vmul.f32 %v1257, %v1266
  %1270 = vrot.lane.b32.xlu0 %v1268, 32
  %v1271 = vpop.permute.xlu0 %1270
  %v1273 = vadd.f32 %v1263, %v1271
  %v1274 = vtanh.pop %v1273
  %1276 = vrot.lane.b32.xlu0 %v1274, 64
  %v1277 = vpop.permute.xlu0 %1276
  %v1279 = vmul.f32 %v1257, %v1277
  %v1280 = vadd.f32 %v1204, %v682
  %v1281 = vxor.u32 %v1280, 2147483648
  %v1282 = vmul.f32 %v1281, 1.442695
  %v1283 = vpow.pop %v1282
  %v1284 = vadd.f32 %v1283, 1.0
  %v1285 = vrcp.pop %v1284
  %v1286 = vmul.f32 1.0, %v1285
  %v1287 = vtanh.pop %v1280
  %1289 = vrot.lane.b32.xlu0 %v1152, 32
  %v1290 = vpop.permute.xlu0 %1289
  %v1292 = vmul.f32 %v1286, %v1290
  %1294 = vrot.lane.b32.xlu0 %v1287, 64
  %v1295 = vpop.permute.xlu0 %1294
  %v1297 = vmul.f32 %v1286, %v1295
  %1299 = vrot.lane.b32.xlu0 %v1297, 32
  %v1300 = vpop.permute.xlu0 %1299
  %v1302 = vadd.f32 %v1292, %v1300
  %v1303 = vtanh.pop %v1302
  %1305 = vrot.lane.b32.xlu0 %v1303, 64
  %v1306 = vpop.permute.xlu0 %1305
  %v1308 = vmul.f32 %v1286, %v1306
  %v1309 = vadd.f32 %v1243, %v1096
  %v1310 = vxor.u32 %v1309, 2147483648
  %v1311 = vmul.f32 %v1310, 1.442695
  %v1312 = vpow.pop %v1311
  %v1313 = vadd.f32 %v1312, 1.0
  %v1314 = vrcp.pop %v1313
  %v1315 = vmul.f32 1.0, %v1314
  %v1316 = vtanh.pop %v1309
  %1318 = vrot.lane.b32.xlu0 %v1132, 32
  %v1319 = vpop.permute.xlu0 %1318
  %v1321 = vmul.f32 %v1315, %v1319
  %1323 = vrot.lane.b32.xlu0 %v1316, 64
  %v1324 = vpop.permute.xlu0 %1323
  %v1326 = vmul.f32 %v1315, %v1324
  %1328 = vrot.lane.b32.xlu0 %v1326, 32
  %v1329 = vpop.permute.xlu0 %1328
  %v1331 = vadd.f32 %v1321, %v1329
  %v1332 = vtanh.pop %v1331
  %1334 = vrot.lane.b32.xlu0 %v1332, 64
  %v1335 = vpop.permute.xlu0 %1334
  %v1337 = vmul.f32 %v1315, %v1335
  %1339 = vrot.lane.b32.xlu0 %v1337, 32
  %v1340 = vpop.permute.xlu0 %1339
  %v1342 = vsel %vm1033, %v1340, %v1127
  %1344 = vrot.lane.b32.xlu0 %v1331, 96
  %v1345 = vpop.permute.xlu0 %1344
  %v1347 = vsel %vm1033, %v1345, %v1132
  %1349 = vrot.lane.b32.xlu0 %v1279, 32
  %v1350 = vpop.permute.xlu0 %1349
  %v1352 = vsel %vm1250, %v1350, %v1137
  %1354 = vrot.lane.b32.xlu0 %v1273, 96
  %v1355 = vpop.permute.xlu0 %1354
  %v1357 = vsel %vm1250, %v1355, %v1142
  %1359 = vrot.lane.b32.xlu0 %v1308, 32
  %v1360 = vpop.permute.xlu0 %1359
  %v1362 = vsel %vm1250, %v1360, %v1147
  %1364 = vrot.lane.b32.xlu0 %v1302, 96
  %v1365 = vpop.permute.xlu0 %1364
  %v1367 = vsel %vm1250, %v1365, %v1152
  %1369 = vrot.lane.b32.xlu0 %v1362, 32
  %v1370 = vpop.permute.xlu0 %1369
  %1373 = vrot.lane.b32.xlu0 %v1342, 64
  %v1374 = vpop.permute.xlu0 %1373
  %v1376 = vsel %vm71, %v1352, %v1370
  %v1377 = vsel %vm908, %v1376, %v1374
  %v1378 = vpack.c.bf16 %v1377, %v1377
  %v1380 = vsel %vm786, %v1378, 0
  %1382 = vmatprep.subr.bf16.mxu0 0
  %1383 = vmatpush1.bf16.msra.mxu0 0
  %1384 = vmatprep.subr.bf16.mxu0 0
  %1385 = vmatpush1.bf16.msra.mxu0 0
  %1386 = vmatprep.subr.bf16.mxu0 %v773
  %1387 = vmatpush1.bf16.msra.mxu0 %v772
  %1388 = vmatprep.subr.bf16.mxu0 %v771
  %1389 = vmatpush1.bf16.msra.mxu0 %v770
  %1390 = vmatprep.subr.bf16.mxu0 %v769
  %1391 = vmatpush1.bf16.msra.mxu0 %v768
  %1392 = vmatprep.subr.bf16.mxu0 %v767
  %1393 = vmatpush1.bf16.msra.mxu0 %v766
  %1394 = vmatprep.subr.bf16.mxu0 %v765
  %1395 = vmatpush1.bf16.msra.mxu0 %v764
  %1396 = vmatprep.subr.bf16.mxu0 %v763
  %1397 = vmatpush1.bf16.msra.mxu0 %v762
  %1398 = vmatprep.subr.bf16.mxu0 0
  %1399 = vmatpush2.bf16.msra.mxu0 0
  %1400 = vmatprep.subr.bf16.mxu0 0
  %1401 = vmatpush2.bf16.msra.mxu0 0
  %1402 = vmatprep.subr.bf16.mxu0 0
  %1403 = vmatpush2.bf16.msra.mxu0 0
  %1404 = vmatprep.subr.bf16.mxu0 0
  %1405 = vmatpush2.bf16.msra.mxu0 0
  %1406 = vmatprep.subr.bf16.mxu0 0
  %1407 = vmatpush2.bf16.msra.mxu0 0
  %1408 = vmatprep.subr.bf16.mxu0 0
  %1409 = vmatpush2.bf16.msra.mxu0 0
  %1410 = vmatprep.subr.bf16.mxu0 0
  %1411 = vmatpush2.bf16.msra.mxu0 0
  %1412 = vmatprep.subr.bf16.mxu0 0
  %1413 = vmatpush2.bf16.msra.mxu0 0
  %1414 = vmatprep.mubr.bf16.mxu0 0
  %1415 = vmatmul.mubr.bf16.gmra.mxu0 %v1380
  %v1416 = vpop.f32.mrf.mxu0
  %v1417 = vadd.f32 0.0, %v1416
  %v1418 = vpop.f32.mrf.mxu0
  %v1419 = vadd.f32 0.0, %v1418
  %v1420 = vpop.f32.mrf.mxu0
  %v1421 = vpop.f32.mrf.mxu0
  %1422 = vdwg.mxu0
  %1423 = vmatprep.subr.bf16.mxu0 0
  %1424 = vmatpush1.bf16.msra.mxu0 0
  %1425 = vmatprep.subr.bf16.mxu0 0
  %1426 = vmatpush1.bf16.msra.mxu0 0
  %1427 = vmatprep.subr.bf16.mxu0 0
  %1428 = vmatpush1.bf16.msra.mxu0 %v940
  %1429 = vmatprep.subr.bf16.mxu0 0
  %1430 = vmatpush1.bf16.msra.mxu0 %v939
  %1431 = vmatprep.subr.bf16.mxu0 0
  %1432 = vmatpush1.bf16.msra.mxu0 %v938
  %1433 = vmatprep.subr.bf16.mxu0 0
  %1434 = vmatpush1.bf16.msra.mxu0 %v937
  %1435 = vmatprep.subr.bf16.mxu0 0
  %1436 = vmatpush1.bf16.msra.mxu0 %v936
  %1437 = vmatprep.subr.bf16.mxu0 0
  %1438 = vmatpush1.bf16.msra.mxu0 %v935
  %1439 = vmatprep.subr.bf16.mxu0 0
  %1440 = vmatpush2.bf16.msra.mxu0 0
  %1441 = vmatprep.subr.bf16.mxu0 0
  %1442 = vmatpush2.bf16.msra.mxu0 0
  %1443 = vmatprep.subr.bf16.mxu0 0
  %1444 = vmatpush2.bf16.msra.mxu0 0
  %1445 = vmatprep.subr.bf16.mxu0 0
  %1446 = vmatpush2.bf16.msra.mxu0 0
  %1447 = vmatprep.subr.bf16.mxu0 0
  %1448 = vmatpush2.bf16.msra.mxu0 0
  %1449 = vmatprep.subr.bf16.mxu0 0
  %1450 = vmatpush2.bf16.msra.mxu0 0
  %1451 = vmatprep.subr.bf16.mxu0 0
  %1452 = vmatpush2.bf16.msra.mxu0 0
  %1453 = vmatprep.subr.bf16.mxu0 0
  %1454 = vmatpush2.bf16.msra.mxu0 0
  %1455 = vmatprep.mubr.bf16.mxu0 0
  %1456 = vmatmul.mubr.bf16.gmra.mxu0 %v1380
  %v1457 = vpop.f32.mrf.mxu0
  %v1458 = vadd.f32 0.0, %v1457
  %v1459 = vpop.f32.mrf.mxu0
  %v1460 = vpop.f32.mrf.mxu0
  %v1461 = vpop.f32.mrf.mxu0
  %1462 = vdwg.mxu0
  %s1463 = scalar_lea.vmem %s14, 24
  %v1464 = vld [vmem:[%s1463] sm:$0xff]
  %vm1465 = vcmp.gt.f32.partialorder %v1464, 0.5
  %v1466 = vadd.f32 %v1417, %v172
  %v1467 = vxor.u32 %v1466, 2147483648
  %v1468 = vmul.f32 %v1467, 1.442695
  %v1469 = vpow.pop %v1468
  %v1470 = vadd.f32 %v1469, 1.0
  %v1471 = vrcp.pop %v1470
  %v1472 = vmul.f32 1.0, %v1471
  %v1473 = vtanh.pop %v1466
  %1475 = vrot.lane.b32.xlu0 %v1357, 32
  %v1476 = vpop.permute.xlu0 %1475
  %v1478 = vmul.f32 %v1472, %v1476
  %1480 = vrot.lane.b32.xlu0 %v1473, 64
  %v1481 = vpop.permute.xlu0 %1480
  %v1483 = vmul.f32 %v1472, %v1481
  %1485 = vrot.lane.b32.xlu0 %v1483, 32
  %v1486 = vpop.permute.xlu0 %1485
  %v1488 = vadd.f32 %v1478, %v1486
  %v1489 = vtanh.pop %v1488
  %1491 = vrot.lane.b32.xlu0 %v1489, 64
  %v1492 = vpop.permute.xlu0 %1491
  %v1494 = vmul.f32 %v1472, %v1492
  %v1495 = vadd.f32 %v1419, %v687
  %v1496 = vxor.u32 %v1495, 2147483648
  %v1497 = vmul.f32 %v1496, 1.442695
  %v1498 = vpow.pop %v1497
  %v1499 = vadd.f32 %v1498, 1.0
  %v1500 = vrcp.pop %v1499
  %v1501 = vmul.f32 1.0, %v1500
  %v1502 = vtanh.pop %v1495
  %1504 = vrot.lane.b32.xlu0 %v1367, 32
  %v1505 = vpop.permute.xlu0 %1504
  %v1507 = vmul.f32 %v1501, %v1505
  %1509 = vrot.lane.b32.xlu0 %v1502, 64
  %v1510 = vpop.permute.xlu0 %1509
  %v1512 = vmul.f32 %v1501, %v1510
  %1514 = vrot.lane.b32.xlu0 %v1512, 32
  %v1515 = vpop.permute.xlu0 %1514
  %v1517 = vadd.f32 %v1507, %v1515
  %v1518 = vtanh.pop %v1517
  %1520 = vrot.lane.b32.xlu0 %v1518, 64
  %v1521 = vpop.permute.xlu0 %1520
  %v1523 = vmul.f32 %v1501, %v1521
  %v1524 = vadd.f32 %v1458, %v1096
  %v1525 = vxor.u32 %v1524, 2147483648
  %v1526 = vmul.f32 %v1525, 1.442695
  %v1527 = vpow.pop %v1526
  %v1528 = vadd.f32 %v1527, 1.0
  %v1529 = vrcp.pop %v1528
  %v1530 = vmul.f32 1.0, %v1529
  %v1531 = vtanh.pop %v1524
  %1533 = vrot.lane.b32.xlu0 %v1347, 32
  %v1534 = vpop.permute.xlu0 %1533
  %v1536 = vmul.f32 %v1530, %v1534
  %1538 = vrot.lane.b32.xlu0 %v1531, 64
  %v1539 = vpop.permute.xlu0 %1538
  %v1541 = vmul.f32 %v1530, %v1539
  %1543 = vrot.lane.b32.xlu0 %v1541, 32
  %v1544 = vpop.permute.xlu0 %1543
  %v1546 = vadd.f32 %v1536, %v1544
  %v1547 = vtanh.pop %v1546
  %1549 = vrot.lane.b32.xlu0 %v1547, 64
  %v1550 = vpop.permute.xlu0 %1549
  %v1552 = vmul.f32 %v1530, %v1550
  %1554 = vrot.lane.b32.xlu0 %v1552, 32
  %v1555 = vpop.permute.xlu0 %1554
  %v1557 = vsel %vm1250, %v1555, %v1342
  %1559 = vrot.lane.b32.xlu0 %v1546, 96
  %v1560 = vpop.permute.xlu0 %1559
  %v1562 = vsel %vm1250, %v1560, %v1347
  %1564 = vrot.lane.b32.xlu0 %v1494, 32
  %v1565 = vpop.permute.xlu0 %1564
  %v1567 = vsel %vm1465, %v1565, %v1352
  %1569 = vrot.lane.b32.xlu0 %v1488, 96
  %v1570 = vpop.permute.xlu0 %1569
  %v1572 = vsel %vm1465, %v1570, %v1357
  %1574 = vrot.lane.b32.xlu0 %v1523, 32
  %v1575 = vpop.permute.xlu0 %1574
  %v1577 = vsel %vm1465, %v1575, %v1362
  %1579 = vrot.lane.b32.xlu0 %v1517, 96
  %v1580 = vpop.permute.xlu0 %1579
  %v1582 = vsel %vm1465, %v1580, %v1367
  %1584 = vrot.lane.b32.xlu0 %v1577, 32
  %v1585 = vpop.permute.xlu0 %1584
  %1588 = vrot.lane.b32.xlu0 %v1557, 64
  %v1589 = vpop.permute.xlu0 %1588
  %v1591 = vsel %vm71, %v1567, %v1585
  %v1592 = vsel %vm908, %v1591, %v1589
  %v1593 = vpack.c.bf16 %v1592, %v1592
  %v1595 = vsel %vm786, %v1593, 0
  %1597 = vmatprep.subr.bf16.mxu0 0
  %1598 = vmatpush1.bf16.msra.mxu0 0
  %1599 = vmatprep.subr.bf16.mxu0 0
  %1600 = vmatpush1.bf16.msra.mxu0 0
  %1601 = vmatprep.subr.bf16.mxu0 %v773
  %1602 = vmatpush1.bf16.msra.mxu0 %v772
  %1603 = vmatprep.subr.bf16.mxu0 %v771
  %1604 = vmatpush1.bf16.msra.mxu0 %v770
  %1605 = vmatprep.subr.bf16.mxu0 %v769
  %1606 = vmatpush1.bf16.msra.mxu0 %v768
  %1607 = vmatprep.subr.bf16.mxu0 %v767
  %1608 = vmatpush1.bf16.msra.mxu0 %v766
  %1609 = vmatprep.subr.bf16.mxu0 %v765
  %1610 = vmatpush1.bf16.msra.mxu0 %v764
  %1611 = vmatprep.subr.bf16.mxu0 %v763
  %1612 = vmatpush1.bf16.msra.mxu0 %v762
  %1613 = vmatprep.subr.bf16.mxu0 0
  %1614 = vmatpush2.bf16.msra.mxu0 0
  %1615 = vmatprep.subr.bf16.mxu0 0
  %1616 = vmatpush2.bf16.msra.mxu0 0
  %1617 = vmatprep.subr.bf16.mxu0 0
  %1618 = vmatpush2.bf16.msra.mxu0 0
  %1619 = vmatprep.subr.bf16.mxu0 0
  %1620 = vmatpush2.bf16.msra.mxu0 0
  %1621 = vmatprep.subr.bf16.mxu0 0
  %1622 = vmatpush2.bf16.msra.mxu0 0
  %1623 = vmatprep.subr.bf16.mxu0 0
  %1624 = vmatpush2.bf16.msra.mxu0 0
  %1625 = vmatprep.subr.bf16.mxu0 0
  %1626 = vmatpush2.bf16.msra.mxu0 0
  %1627 = vmatprep.subr.bf16.mxu0 0
  %1628 = vmatpush2.bf16.msra.mxu0 0
  %1629 = vmatprep.mubr.bf16.mxu0 0
  %1630 = vmatmul.mubr.bf16.gmra.mxu0 %v1595
  %v1631 = vpop.f32.mrf.mxu0
  %v1632 = vadd.f32 0.0, %v1631
  %v1633 = vpop.f32.mrf.mxu0
  %v1634 = vadd.f32 0.0, %v1633
  %v1635 = vpop.f32.mrf.mxu0
  %v1636 = vpop.f32.mrf.mxu0
  %1637 = vdwg.mxu0
  %1638 = vmatprep.subr.bf16.mxu0 0
  %1639 = vmatpush1.bf16.msra.mxu0 0
  %1640 = vmatprep.subr.bf16.mxu0 0
  %1641 = vmatpush1.bf16.msra.mxu0 0
  %1642 = vmatprep.subr.bf16.mxu0 0
  %1643 = vmatpush1.bf16.msra.mxu0 %v940
  %1644 = vmatprep.subr.bf16.mxu0 0
  %1645 = vmatpush1.bf16.msra.mxu0 %v939
  %1646 = vmatprep.subr.bf16.mxu0 0
  %1647 = vmatpush1.bf16.msra.mxu0 %v938
  %1648 = vmatprep.subr.bf16.mxu0 0
  %1649 = vmatpush1.bf16.msra.mxu0 %v937
  %1650 = vmatprep.subr.bf16.mxu0 0
  %1651 = vmatpush1.bf16.msra.mxu0 %v936
  %1652 = vmatprep.subr.bf16.mxu0 0
  %1653 = vmatpush1.bf16.msra.mxu0 %v935
  %1654 = vmatprep.subr.bf16.mxu0 0
  %1655 = vmatpush2.bf16.msra.mxu0 0
  %1656 = vmatprep.subr.bf16.mxu0 0
  %1657 = vmatpush2.bf16.msra.mxu0 0
  %1658 = vmatprep.subr.bf16.mxu0 0
  %1659 = vmatpush2.bf16.msra.mxu0 0
  %1660 = vmatprep.subr.bf16.mxu0 0
  %1661 = vmatpush2.bf16.msra.mxu0 0
  %1662 = vmatprep.subr.bf16.mxu0 0
  %1663 = vmatpush2.bf16.msra.mxu0 0
  %1664 = vmatprep.subr.bf16.mxu0 0
  %1665 = vmatpush2.bf16.msra.mxu0 0
  %1666 = vmatprep.subr.bf16.mxu0 0
  %1667 = vmatpush2.bf16.msra.mxu0 0
  %1668 = vmatprep.subr.bf16.mxu0 0
  %1669 = vmatpush2.bf16.msra.mxu0 0
  %1670 = vmatprep.mubr.bf16.mxu0 0
  %1671 = vmatmul.mubr.bf16.gmra.mxu0 %v1595
  %v1672 = vpop.f32.mrf.mxu0
  %v1673 = vadd.f32 0.0, %v1672
  %v1674 = vpop.f32.mrf.mxu0
  %v1675 = vpop.f32.mrf.mxu0
  %v1676 = vpop.f32.mrf.mxu0
  %1677 = vdwg.mxu0
  %s1678 = scalar_lea.vmem %s14, 32
  %v1679 = vld [vmem:[%s1678] sm:$0xff]
  %vm1680 = vcmp.gt.f32.partialorder %v1679, 0.5
  %v1681 = vadd.f32 %v1632, %v177
  %v1682 = vxor.u32 %v1681, 2147483648
  %v1683 = vmul.f32 %v1682, 1.442695
  %v1684 = vpow.pop %v1683
  %v1685 = vadd.f32 %v1684, 1.0
  %v1686 = vrcp.pop %v1685
  %v1687 = vmul.f32 1.0, %v1686
  %v1688 = vtanh.pop %v1681
  %1690 = vrot.lane.b32.xlu0 %v1572, 32
  %v1691 = vpop.permute.xlu0 %1690
  %v1693 = vmul.f32 %v1687, %v1691
  %1695 = vrot.lane.b32.xlu0 %v1688, 64
  %v1696 = vpop.permute.xlu0 %1695
  %v1698 = vmul.f32 %v1687, %v1696
  %1700 = vrot.lane.b32.xlu0 %v1698, 32
  %v1701 = vpop.permute.xlu0 %1700
  %v1703 = vadd.f32 %v1693, %v1701
  %v1704 = vtanh.pop %v1703
  %1706 = vrot.lane.b32.xlu0 %v1704, 64
  %v1707 = vpop.permute.xlu0 %1706
  %v1709 = vmul.f32 %v1687, %v1707
  %v1710 = vadd.f32 %v1634, %v692
  %v1711 = vxor.u32 %v1710, 2147483648
  %v1712 = vmul.f32 %v1711, 1.442695
  %v1713 = vpow.pop %v1712
  %v1714 = vadd.f32 %v1713, 1.0
  %v1715 = vrcp.pop %v1714
  %v1716 = vmul.f32 1.0, %v1715
  %v1717 = vtanh.pop %v1710
  %1719 = vrot.lane.b32.xlu0 %v1582, 32
  %v1720 = vpop.permute.xlu0 %1719
  %v1722 = vmul.f32 %v1716, %v1720
  %1724 = vrot.lane.b32.xlu0 %v1717, 64
  %v1725 = vpop.permute.xlu0 %1724
  %v1727 = vmul.f32 %v1716, %v1725
  %1729 = vrot.lane.b32.xlu0 %v1727, 32
  %v1730 = vpop.permute.xlu0 %1729
  %v1732 = vadd.f32 %v1722, %v1730
  %v1733 = vtanh.pop %v1732
  %1735 = vrot.lane.b32.xlu0 %v1733, 64
  %v1736 = vpop.permute.xlu0 %1735
  %v1738 = vmul.f32 %v1716, %v1736
  %v1739 = vadd.f32 %v1673, %v1096
  %v1740 = vxor.u32 %v1739, 2147483648
  %v1741 = vmul.f32 %v1740, 1.442695
  %v1742 = vpow.pop %v1741
  %v1743 = vadd.f32 %v1742, 1.0
  %v1744 = vrcp.pop %v1743
  %v1745 = vmul.f32 1.0, %v1744
  %v1746 = vtanh.pop %v1739
  %1748 = vrot.lane.b32.xlu0 %v1562, 32
  %v1749 = vpop.permute.xlu0 %1748
  %v1751 = vmul.f32 %v1745, %v1749
  %1753 = vrot.lane.b32.xlu0 %v1746, 64
  %v1754 = vpop.permute.xlu0 %1753
  %v1756 = vmul.f32 %v1745, %v1754
  %1758 = vrot.lane.b32.xlu0 %v1756, 32
  %v1759 = vpop.permute.xlu0 %1758
  %v1761 = vadd.f32 %v1751, %v1759
  %v1762 = vtanh.pop %v1761
  %1764 = vrot.lane.b32.xlu0 %v1762, 64
  %v1765 = vpop.permute.xlu0 %1764
  %v1767 = vmul.f32 %v1745, %v1765
  %1769 = vrot.lane.b32.xlu0 %v1767, 32
  %v1770 = vpop.permute.xlu0 %1769
  %v1772 = vsel %vm1465, %v1770, %v1557
  %1774 = vrot.lane.b32.xlu0 %v1761, 96
  %v1775 = vpop.permute.xlu0 %1774
  %v1777 = vsel %vm1465, %v1775, %v1562
  %1779 = vrot.lane.b32.xlu0 %v1709, 32
  %v1780 = vpop.permute.xlu0 %1779
  %v1782 = vsel %vm1680, %v1780, %v1567
  %1784 = vrot.lane.b32.xlu0 %v1703, 96
  %v1785 = vpop.permute.xlu0 %1784
  %v1787 = vsel %vm1680, %v1785, %v1572
  %1789 = vrot.lane.b32.xlu0 %v1738, 32
  %v1790 = vpop.permute.xlu0 %1789
  %v1792 = vsel %vm1680, %v1790, %v1577
  %1794 = vrot.lane.b32.xlu0 %v1732, 96
  %v1795 = vpop.permute.xlu0 %1794
  %v1797 = vsel %vm1680, %v1795, %v1582
  %1799 = vrot.lane.b32.xlu0 %v1792, 32
  %v1800 = vpop.permute.xlu0 %1799
  %1803 = vrot.lane.b32.xlu0 %v1772, 64
  %v1804 = vpop.permute.xlu0 %1803
  %v1806 = vsel %vm71, %v1782, %v1800
  %v1807 = vsel %vm908, %v1806, %v1804
  %v1808 = vpack.c.bf16 %v1807, %v1807
  %v1810 = vsel %vm786, %v1808, 0
  %1812 = vmatprep.subr.bf16.mxu0 0
  %1813 = vmatpush1.bf16.msra.mxu0 0
  %1814 = vmatprep.subr.bf16.mxu0 0
  %1815 = vmatpush1.bf16.msra.mxu0 0
  %1816 = vmatprep.subr.bf16.mxu0 %v773
  %1817 = vmatpush1.bf16.msra.mxu0 %v772
  %1818 = vmatprep.subr.bf16.mxu0 %v771
  %1819 = vmatpush1.bf16.msra.mxu0 %v770
  %1820 = vmatprep.subr.bf16.mxu0 %v769
  %1821 = vmatpush1.bf16.msra.mxu0 %v768
  %1822 = vmatprep.subr.bf16.mxu0 %v767
  %1823 = vmatpush1.bf16.msra.mxu0 %v766
  %1824 = vmatprep.subr.bf16.mxu0 %v765
  %1825 = vmatpush1.bf16.msra.mxu0 %v764
  %1826 = vmatprep.subr.bf16.mxu0 %v763
  %1827 = vmatpush1.bf16.msra.mxu0 %v762
  %1828 = vmatprep.subr.bf16.mxu0 0
  %1829 = vmatpush2.bf16.msra.mxu0 0
  %1830 = vmatprep.subr.bf16.mxu0 0
  %1831 = vmatpush2.bf16.msra.mxu0 0
  %1832 = vmatprep.subr.bf16.mxu0 0
  %1833 = vmatpush2.bf16.msra.mxu0 0
  %1834 = vmatprep.subr.bf16.mxu0 0
  %1835 = vmatpush2.bf16.msra.mxu0 0
  %1836 = vmatprep.subr.bf16.mxu0 0
  %1837 = vmatpush2.bf16.msra.mxu0 0
  %1838 = vmatprep.subr.bf16.mxu0 0
  %1839 = vmatpush2.bf16.msra.mxu0 0
  %1840 = vmatprep.subr.bf16.mxu0 0
  %1841 = vmatpush2.bf16.msra.mxu0 0
  %1842 = vmatprep.subr.bf16.mxu0 0
  %1843 = vmatpush2.bf16.msra.mxu0 0
  %1844 = vmatprep.mubr.bf16.mxu0 0
  %1845 = vmatmul.mubr.bf16.gmra.mxu0 %v1810
  %v1846 = vpop.f32.mrf.mxu0
  %v1847 = vadd.f32 0.0, %v1846
  %v1848 = vpop.f32.mrf.mxu0
  %v1849 = vadd.f32 0.0, %v1848
  %v1850 = vpop.f32.mrf.mxu0
  %v1851 = vpop.f32.mrf.mxu0
  %1852 = vdwg.mxu0
  %1853 = vmatprep.subr.bf16.mxu0 0
  %1854 = vmatpush1.bf16.msra.mxu0 0
  %1855 = vmatprep.subr.bf16.mxu0 0
  %1856 = vmatpush1.bf16.msra.mxu0 0
  %1857 = vmatprep.subr.bf16.mxu0 0
  %1858 = vmatpush1.bf16.msra.mxu0 %v940
  %1859 = vmatprep.subr.bf16.mxu0 0
  %1860 = vmatpush1.bf16.msra.mxu0 %v939
  %1861 = vmatprep.subr.bf16.mxu0 0
  %1862 = vmatpush1.bf16.msra.mxu0 %v938
  %1863 = vmatprep.subr.bf16.mxu0 0
  %1864 = vmatpush1.bf16.msra.mxu0 %v937
  %1865 = vmatprep.subr.bf16.mxu0 0
  %1866 = vmatpush1.bf16.msra.mxu0 %v936
  %1867 = vmatprep.subr.bf16.mxu0 0
  %1868 = vmatpush1.bf16.msra.mxu0 %v935
  %1869 = vmatprep.subr.bf16.mxu0 0
  %1870 = vmatpush2.bf16.msra.mxu0 0
  %1871 = vmatprep.subr.bf16.mxu0 0
  %1872 = vmatpush2.bf16.msra.mxu0 0
  %1873 = vmatprep.subr.bf16.mxu0 0
  %1874 = vmatpush2.bf16.msra.mxu0 0
  %1875 = vmatprep.subr.bf16.mxu0 0
  %1876 = vmatpush2.bf16.msra.mxu0 0
  %1877 = vmatprep.subr.bf16.mxu0 0
  %1878 = vmatpush2.bf16.msra.mxu0 0
  %1879 = vmatprep.subr.bf16.mxu0 0
  %1880 = vmatpush2.bf16.msra.mxu0 0
  %1881 = vmatprep.subr.bf16.mxu0 0
  %1882 = vmatpush2.bf16.msra.mxu0 0
  %1883 = vmatprep.subr.bf16.mxu0 0
  %1884 = vmatpush2.bf16.msra.mxu0 0
  %1885 = vmatprep.mubr.bf16.mxu0 0
  %1886 = vmatmul.mubr.bf16.gmra.mxu0 %v1810
  %v1887 = vpop.f32.mrf.mxu0
  %v1888 = vadd.f32 0.0, %v1887
  %v1889 = vpop.f32.mrf.mxu0
  %v1890 = vpop.f32.mrf.mxu0
  %v1891 = vpop.f32.mrf.mxu0
  %1892 = vdwg.mxu0
  %s1893 = scalar_lea.vmem %s14, 40
  %v1894 = vld [vmem:[%s1893] sm:$0xff]
  %vm1895 = vcmp.gt.f32.partialorder %v1894, 0.5
  %v1896 = vadd.f32 %v1847, %v182
  %v1897 = vxor.u32 %v1896, 2147483648
  %v1898 = vmul.f32 %v1897, 1.442695
  %v1899 = vpow.pop %v1898
  %v1900 = vadd.f32 %v1899, 1.0
  %v1901 = vrcp.pop %v1900
  %v1902 = vmul.f32 1.0, %v1901
  %v1903 = vtanh.pop %v1896
  %1905 = vrot.lane.b32.xlu0 %v1787, 32
  %v1906 = vpop.permute.xlu0 %1905
  %v1908 = vmul.f32 %v1902, %v1906
  %1910 = vrot.lane.b32.xlu0 %v1903, 64
  %v1911 = vpop.permute.xlu0 %1910
  %v1913 = vmul.f32 %v1902, %v1911
  %1915 = vrot.lane.b32.xlu0 %v1913, 32
  %v1916 = vpop.permute.xlu0 %1915
  %v1918 = vadd.f32 %v1908, %v1916
  %v1919 = vtanh.pop %v1918
  %1921 = vrot.lane.b32.xlu0 %v1919, 64
  %v1922 = vpop.permute.xlu0 %1921
  %v1924 = vmul.f32 %v1902, %v1922
  %v1925 = vadd.f32 %v1849, %v697
  %v1926 = vxor.u32 %v1925, 2147483648
  %v1927 = vmul.f32 %v1926, 1.442695
  %v1928 = vpow.pop %v1927
  %v1929 = vadd.f32 %v1928, 1.0
  %v1930 = vrcp.pop %v1929
  %v1931 = vmul.f32 1.0, %v1930
  %v1932 = vtanh.pop %v1925
  %1934 = vrot.lane.b32.xlu0 %v1797, 32
  %v1935 = vpop.permute.xlu0 %1934
  %v1937 = vmul.f32 %v1931, %v1935
  %1939 = vrot.lane.b32.xlu0 %v1932, 64
  %v1940 = vpop.permute.xlu0 %1939
  %v1942 = vmul.f32 %v1931, %v1940
  %1944 = vrot.lane.b32.xlu0 %v1942, 32
  %v1945 = vpop.permute.xlu0 %1944
  %v1947 = vadd.f32 %v1937, %v1945
  %v1948 = vtanh.pop %v1947
  %1950 = vrot.lane.b32.xlu0 %v1948, 64
  %v1951 = vpop.permute.xlu0 %1950
  %v1953 = vmul.f32 %v1931, %v1951
  %v1954 = vadd.f32 %v1888, %v1096
  %v1955 = vxor.u32 %v1954, 2147483648
  %v1956 = vmul.f32 %v1955, 1.442695
  %v1957 = vpow.pop %v1956
  %v1958 = vadd.f32 %v1957, 1.0
  %v1959 = vrcp.pop %v1958
  %v1960 = vmul.f32 1.0, %v1959
  %v1961 = vtanh.pop %v1954
  %1963 = vrot.lane.b32.xlu0 %v1777, 32
  %v1964 = vpop.permute.xlu0 %1963
  %v1966 = vmul.f32 %v1960, %v1964
  %1968 = vrot.lane.b32.xlu0 %v1961, 64
  %v1969 = vpop.permute.xlu0 %1968
  %v1971 = vmul.f32 %v1960, %v1969
  %1973 = vrot.lane.b32.xlu0 %v1971, 32
  %v1974 = vpop.permute.xlu0 %1973
  %v1976 = vadd.f32 %v1966, %v1974
  %v1977 = vtanh.pop %v1976
  %1979 = vrot.lane.b32.xlu0 %v1977, 64
  %v1980 = vpop.permute.xlu0 %1979
  %v1982 = vmul.f32 %v1960, %v1980
  %1984 = vrot.lane.b32.xlu0 %v1982, 32
  %v1985 = vpop.permute.xlu0 %1984
  %v1987 = vsel %vm1680, %v1985, %v1772
  %1989 = vrot.lane.b32.xlu0 %v1976, 96
  %v1990 = vpop.permute.xlu0 %1989
  %v1992 = vsel %vm1680, %v1990, %v1777
  %1994 = vrot.lane.b32.xlu0 %v1924, 32
  %v1995 = vpop.permute.xlu0 %1994
  %v1997 = vsel %vm1895, %v1995, %v1782
  %1999 = vrot.lane.b32.xlu0 %v1953, 32
  %v2000 = vpop.permute.xlu0 %1999
  %v2002 = vsel %vm1895, %v2000, %v1792
  %2004 = vrot.lane.b32.xlu0 %v1987, 32
  %v2005 = vpop.permute.xlu0 %2004
  %v2007 = vsel %vm71, %v1997, %v2005
  %v2008 = vpack.c.bf16 %v2007, %v2007
  %v2009 = vld [vmem:[%s12] sm:$0xf]
  %v2010 = vld [vmem:[%s12 + $0x4] sm:$0xf]
  %v2011 = vld [vmem:[%s12 + $0x8] sm:$0xf]
  %v2012 = vld [vmem:[%s12 + $0xc] sm:$0xf]
  %v2013 = vld [vmem:[%s12 + $0x10] sm:$0xf]
  %v2014 = vld [vmem:[%s12 + $0x14] sm:$0xf]
  %v2015 = vld [vmem:[%s12 + $0x18] sm:$0xf]
  %v2016 = vld [vmem:[%s12 + $0x1c] sm:$0xf]
  %v2025 = vunpack.c.l.b16 %v2009
  %v2026 = vunpack.c.l.b16 %v2010
  %v2027 = vunpack.c.l.b16 %v2011
  %v2028 = vunpack.c.l.b16 %v2012
  %v2029 = vunpack.c.l.b16 %v2013
  %v2030 = vunpack.c.l.b16 %v2014
  %v2031 = vunpack.c.l.b16 %v2015
  %v2032 = vunpack.c.l.b16 %v2016
  %v2033 = vpack.c.b16 %v2026, %v2025
  %v2034 = vpack.c.b16 %v2028, %v2027
  %v2035 = vpack.c.b16 %v2030, %v2029
  %v2036 = vpack.c.b16 %v2032, %v2031
  %v2042 = vsel %vm908, %v2008, 0
  %2044 = vmatprep.subr.bf16.mxu0 0
  %2045 = vmatpush1.bf16.msra.mxu0 0
  %2046 = vmatprep.subr.bf16.mxu0 0
  %2047 = vmatpush1.bf16.msra.mxu0 0
  %2048 = vmatprep.subr.bf16.mxu0 0
  %2049 = vmatpush1.bf16.msra.mxu0 0
  %2050 = vmatprep.subr.bf16.mxu0 0
  %2051 = vmatpush1.bf16.msra.mxu0 0
  %2052 = vmatprep.subr.bf16.mxu0 0
  %2053 = vmatpush1.bf16.msra.mxu0 %v2036
  %2054 = vmatprep.subr.bf16.mxu0 0
  %2055 = vmatpush1.bf16.msra.mxu0 %v2035
  %2056 = vmatprep.subr.bf16.mxu0 0
  %2057 = vmatpush1.bf16.msra.mxu0 %v2034
  %2058 = vmatprep.subr.bf16.mxu0 0
  %2059 = vmatpush1.bf16.msra.mxu0 %v2033
  %2060 = vmatprep.subr.bf16.mxu0 0
  %2061 = vmatpush2.bf16.msra.mxu0 0
  %2062 = vmatprep.subr.bf16.mxu0 0
  %2063 = vmatpush2.bf16.msra.mxu0 0
  %2064 = vmatprep.subr.bf16.mxu0 0
  %2065 = vmatpush2.bf16.msra.mxu0 0
  %2066 = vmatprep.subr.bf16.mxu0 0
  %2067 = vmatpush2.bf16.msra.mxu0 0
  %2068 = vmatprep.subr.bf16.mxu0 0
  %2069 = vmatpush2.bf16.msra.mxu0 0
  %2070 = vmatprep.subr.bf16.mxu0 0
  %2071 = vmatpush2.bf16.msra.mxu0 0
  %2072 = vmatprep.subr.bf16.mxu0 0
  %2073 = vmatpush2.bf16.msra.mxu0 0
  %2074 = vmatprep.subr.bf16.mxu0 0
  %2075 = vmatpush2.bf16.msra.mxu0 0
  %2076 = vmatprep.mubr.bf16.mxu0 0
  %2077 = vmatmul.mubr.bf16.gmra.mxu0 %v2042
  %v2078 = vpop.f32.mrf.mxu0
  %v2079 = vadd.f32 %v1096, %v2078
  %v2080 = vpop.f32.mrf.mxu0
  %v2081 = vpop.f32.mrf.mxu0
  %v2082 = vpop.f32.mrf.mxu0
  %2083 = vdwg.mxu0
  %v2084 = vxor.u32 %v2079, 2147483648
  %v2085 = vmul.f32 %v2084, 1.442695
  %v2086 = vpow.pop %v2085
  %v2087 = vadd.f32 %v2086, 1.0
  %v2088 = vrcp.pop %v2087
  %v2089 = vmul.f32 1.0, %v2088
  %v2090 = vtanh.pop %v2079
  %2092 = vrot.lane.b32.xlu0 %v1992, 32
  %v2093 = vpop.permute.xlu0 %2092
  %v2095 = vmul.f32 %v2089, %v2093
  %2097 = vrot.lane.b32.xlu0 %v2090, 64
  %v2098 = vpop.permute.xlu0 %2097
  %v2100 = vmul.f32 %v2089, %v2098
  %2102 = vrot.lane.b32.xlu0 %v2100, 32
  %v2103 = vpop.permute.xlu0 %2102
  %v2105 = vadd.f32 %v2095, %v2103
  %v2106 = vtanh.pop %v2105
  %2108 = vrot.lane.b32.xlu0 %v2106, 64
  %v2109 = vpop.permute.xlu0 %2108
  %v2111 = vmul.f32 %v2089, %v2109
  %2113 = vrot.lane.b32.xlu0 %v2111, 32
  %v2114 = vpop.permute.xlu0 %2113
  %v2116 = vsel %vm1895, %v2114, %v1987
  %2117 = vst.msk [vmem:[%s15] sm:$0xff] %vm71, %v2116
  %2118 = vst.msk [vmem:[%s16] sm:$0xff] %vm71, %v2002
  %v2119 = vsub.f32 %v2116, %v2002
  %v2120 = vand.u32 2147483647, %v2119
  %v2121 = vsel %vm71, %v2120, 0.0
  %2122 = vadd.xlane.f32.xlu0 %v2121
  %v2123 = vpop.xlane.xlu0 %2122
  %v2124 = vsub.f32 0.0, %v2123
  %v2125 = vmul.f32 %v2124, 1.442695
  %v2126 = vpow.pop %v2125
  %vm2127 = vcmask 7168
  %2128 = vst.msk [vmem:[%s17] sm:$0xff] %vm2127, %v2126
  // Predicated region
  $region62: #{model_text_eeg_forward.1} parent=0 // pred_check
    _
  $region63: #{model_text_eeg_forward.1} parent=0 // pred_check_branch
    %2130 = sbr.rel (0) target = $region65
  $region64: #{model_text_eeg_forward.1} parent=0 // pred_region
    _
  $region65: #{model_text_eeg_forward.1} parent=0 // pred_fallthru
    _
  // Predicated region
  $region66: #{model_text_eeg_forward.1} parent=0 // pred_check
    _
  $region67: #{model_text_eeg_forward.1} parent=0 // pred_check_branch
    %2132 = sbr.rel (0) target = $region69
  $region68: #{model_text_eeg_forward.1} parent=0 // pred_region
    _
  $region69: #{model_text_eeg_forward.1} parent=0 // pred_fallthru
    _
  // Predicated region
  $region70: #{model_text_eeg_forward.1} parent=0 // pred_check
    _
  $region71: #{model_text_eeg_forward.1} parent=0 // pred_check_branch
    %2134 = sbr.rel (0) target = $region73
  $region72: #{model_text_eeg_forward.1} parent=0 // pred_region
    _
  $region73: #{model_text_eeg_forward.1} parent=0 // pred_fallthru
    _
  // Predicated region
  $region74: #{model_text_eeg_forward.1} parent=0 // pred_check
    _
  $region75: #{model_text_eeg_forward.1} parent=0 // pred_check_branch
    %2136 = sbr.rel (0) target = $region77
  $region76: #{model_text_eeg_forward.1} parent=0 // pred_region
    _
  $region77: #{model_text_eeg_forward.1} parent=0 // pred_fallthru
    _
  // Predicated region
  $region78: #{model_text_eeg_forward.1} parent=0 // pred_check
    _
  $region79: #{model_text_eeg_forward.1} parent=0 // pred_check_branch
    %2138 = sbr.rel (0) target = $region81
  $region80: #{model_text_eeg_forward.1} parent=0 // pred_region
    _
  $region81: #{model_text_eeg_forward.1} parent=0 // pred_fallthru
    _
  // Predicated region
  $region82: #{model_text_eeg_forward.1} parent=0 // pred_check
    _
  $region83: #{model_text_eeg_forward.1} parent=0 // pred_check_branch
    %2140 = sbr.rel (0) target = $region85
  $region84: #{model_text_eeg_forward.1} parent=0 // pred_region
    _
  $region85: #{model_text_eeg_forward.1} parent=0 // pred_fallthru
    _

</llo_original>
